<compile_context>
chip_gen: v5e
topology: v5e:2x2
jax: 0.10.0
libtpu: 0.0.40
codegen_flags: <defaults>
</compile_context>

<pallas_src>
import functools
import math

import jax
import jax.numpy as jnp
from jax.experimental import pallas as pl
from jax.experimental.pallas import tpu as pltpu


# ---------------------------------------------------------------------------
# Fused kernel: embedding + PE  ->  depth x encoder block  ->  pool + classifier
# ---------------------------------------------------------------------------
def _toxic_forward_kernel(ids_ref, emb_ref, pe_ref, mask_ref,
                          wq_ref, wk_ref, wv_ref, wo_ref,
                          g1_ref, be1_ref, w1_ref, bf1_ref,
                          w2_ref, bf2_ref, g2_ref, be2_ref,
                          wout_ref, bout_ref,
                          out_ref,
                          x_sc,
                          *, h, eps, emb_scale, inv_s):
    l = pl.program_id(1)
    n_l = pl.num_programs(1)

    # ---- phase 1 (first depth step only): token embedding * sqrt(D) + positional ----
    @pl.when(l == 0)
    def _():
        ids = ids_ref[0]                                    # (S, 1) int32
        s = ids.shape[0]
        v = emb_ref.shape[0]
        onehot = (ids == jax.lax.broadcasted_iota(jnp.int32, (s, v), 1)).astype(jnp.float32)
        rows = jnp.dot(onehot, emb_ref[...], preferred_element_type=jnp.float32)   # (S, D)
        x_sc[...] = rows * emb_scale + pe_ref[...]

    # ---- phase 2: encoder block `l` on the VMEM-resident activation ----
    x = x_sc[...]                                           # (S, D) f32
    S, D = x.shape
    d_k = D // h
    inv_qk_scale = 1.0 / math.sqrt(D)                       # module divides by d_model**0.5

    wq = wq_ref[l]                                          # (D, D) — dynamic depth index
    wk = wk_ref[l]
    wv = wv_ref[l]
    wo = wo_ref[l]

    q = jnp.dot(x, wq, preferred_element_type=jnp.float32)
    k = jnp.dot(x, wk, preferred_element_type=jnp.float32)
    v = jnp.dot(x, wv, preferred_element_type=jnp.float32)

    mask = mask_ref[0]                                      # (h, S, S)
    head_outs = []
    for hh in range(h):                                     # small h: unrolled at trace time
        sl = slice(hh * d_k, (hh + 1) * d_k)
        qh, kh, vh = q[:, sl], k[:, sl], v[:, sl]
        scores = jax.lax.dot_general(qh, kh, (((1,), (1,)), ((), ())),
                                     preferred_element_type=jnp.float32) * inv_qk_scale
        scores = jnp.where(mask[hh] == 0, jnp.float32(-1e30), scores)
        scores = scores - jnp.max(scores, axis=-1, keepdims=True)
        p = jnp.exp(scores)
        p = p / jnp.sum(p, axis=-1, keepdims=True)
        head_outs.append(jnp.dot(p, vh, preferred_element_type=jnp.float32))
    attn = jnp.concatenate(head_outs, axis=1)               # (S, D)
    attn = jnp.dot(attn, wo, preferred_element_type=jnp.float32)
    # attention dropout: identity at inference

    x1 = x + attn
    mu = jnp.mean(x1, axis=-1, keepdims=True)
    var = jnp.mean((x1 - mu) ** 2, axis=-1, keepdims=True)
    x1 = (x1 - mu) * jax.lax.rsqrt(var + eps) * g1_ref[l] + be1_ref[l]

    hdn = jnp.maximum(
        jnp.dot(x1, w1_ref[l], preferred_element_type=jnp.float32) + bf1_ref[l], 0.0)
    ffn = jnp.dot(hdn, w2_ref[l], preferred_element_type=jnp.float32) + bf2_ref[l]

    x2 = x1 + ffn
    mu2 = jnp.mean(x2, axis=-1, keepdims=True)
    var2 = jnp.mean((x2 - mu2) ** 2, axis=-1, keepdims=True)
    x2 = (x2 - mu2) * jax.lax.rsqrt(var2 + eps) * g2_ref[l] + be2_ref[l]

    x_sc[...] = x2                                          # carry to next depth step

    # ---- phase 3 (last depth step only): mean-pool + Linear + log_softmax ----
    @pl.when(l == n_l - 1)
    def _():
        pooled = jnp.sum(x2, axis=0, keepdims=True) * inv_s                       # (1, D)
        logits = jnp.dot(pooled, wout_ref[...],
                         preferred_element_type=jnp.float32) + bout_ref[...]      # (1, C)
        z = logits - jnp.max(logits, axis=-1, keepdims=True)
        lse = jnp.log(jnp.sum(jnp.exp(z), axis=-1, keepdims=True))
        out_ref[...] = (z - lse)[None].astype(out_ref.dtype)


def toxic_detector_forward(ids, mask, params):
    B, S = ids.shape
    emb, pe = params['emb'], params['pe']
    V, D = emb.shape
    blocks = params['blocks']
    depth = len(blocks)
    h = mask.shape[1]
    C = params['w_out'].shape[1]

    # Stack per-block parameters along a leading depth axis (VMEM-resident, indexed by l).
    stack = lambda name: jnp.stack([blk[name] for blk in blocks], axis=0)
    wq, wk, wv, wo = stack('wq'), stack('wk'), stack('wv'), stack('wo')
    g1, be1 = stack('g1'), stack('be1')
    w1, bf1 = stack('w1'), stack('bf1')
    w2, bf2 = stack('w2'), stack('bf2')
    g2, be2 = stack('g2'), stack('be2')

    # Clamp ids so out-of-range tokens cannot index outside the table (nn.Embedding would raise).
    ids3 = jnp.clip(ids.astype(jnp.int32), 0, V - 1).reshape(B, S, 1)

    def full(a):
        nd = a.ndim
        return pl.BlockSpec(a.shape, lambda b, l, _nd=nd: (0,) * _nd)

    out = pl.pallas_call(
        functools.partial(_toxic_forward_kernel, h=h, eps=1e-5,
                          emb_scale=float(math.sqrt(D)), inv_s=1.0 / S),
        out_shape=jax.ShapeDtypeStruct((B, 1, C), jnp.float32),
        grid=(B, depth),
        in_specs=[
            pl.BlockSpec((1, S, 1), lambda b, l: (b, 0, 0)),          # token ids
            full(emb), full(pe),                                      # table + PE (resident)
            pl.BlockSpec((1, h, S, S), lambda b, l: (b, 0, 0, 0)),    # per-batch mask
            full(wq), full(wk), full(wv), full(wo),
            full(g1), full(be1), full(w1), full(bf1),
            full(w2), full(bf2), full(g2), full(be2),
            full(params['w_out']), full(params['b_out']),
        ],
        out_specs=pl.BlockSpec((1, 1, C), lambda b, l: (b, 0, 0)),
        scratch_shapes=[pltpu.VMEM((S, D), jnp.float32)],             # activation carried over depth
        compiler_params=pltpu.CompilerParams(
            dimension_semantics=("parallel", "arbitrary")),
    )(ids3, emb, pe, mask, wq, wk, wv, wo, g1, be1, w1, bf1, w2, bf2, g2, be2,
      params['w_out'], params['b_out'])
    return out.reshape(B, C)


# ---------------------------------------------------------------------------
# Pure-JAX reference for correctness checking
# ---------------------------------------------------------------------------
def _ref_layer_norm(x, g, b, eps=1e-5):
    mu = x.mean(-1, keepdims=True)
    var = ((x - mu) ** 2).mean(-1, keepdims=True)
    return (x - mu) * jax.lax.rsqrt(var + eps) * g + b


def reference_forward(ids, mask, params):
    emb, pe = params['emb'], params['pe']
    V, D = emb.shape
    B, S = ids.shape
    x = emb[ids] * math.sqrt(D) + pe[None, :S, :]
    h = mask.shape[1]
    d_k = D // h
    for p in params['blocks']:
        q = (x @ p['wq']).reshape(B, S, h, d_k).transpose(0, 2, 1, 3)
        k = (x @ p['wk']).reshape(B, S, h, d_k).transpose(0, 2, 1, 3)
        v = (x @ p['wv']).reshape(B, S, h, d_k).transpose(0, 2, 1, 3)
        scores = jnp.einsum('bhqd,bhkd->bhqk', q, k) / math.sqrt(D)
        scores = jnp.where(mask == 0, -1e30, scores)
        attn = jax.nn.softmax(scores, axis=-1)
        out = jnp.einsum('bhqk,bhkd->bhqd', attn, v)
        out = out.transpose(0, 2, 1, 3).reshape(B, S, D)
        x = _ref_layer_norm(x + out @ p['wo'], p['g1'], p['be1'])
        ffn = jnp.maximum(x @ p['w1'] + p['bf1'], 0.0) @ p['w2'] + p['bf2']
        x = _ref_layer_norm(x + ffn, p['g2'], p['be2'])
    pooled = x.mean(axis=1)
    logits = pooled @ params['w_out'] + params['b_out']
    return jax.nn.log_softmax(logits, axis=-1)


if __name__ == "__main__":
    config = dict(d_model=32, h=4, seq_len=8, num_classes=2, depth=2, dropout=0.1)
    vocab_size = 64
    batch = 2
    D, H, S, C, depth = (config['d_model'], config['h'], config['seq_len'],
                         config['num_classes'], config['depth'])

    key = jax.random.PRNGKey(0)
    kiter = iter(jax.random.split(key, 64))
    nk = lambda: next(kiter)

    # Embedding table (nn.Embedding default: N(0,1)) and sinusoidal positional buffer.
    emb = jax.random.normal(nk(), (vocab_size, D), jnp.float32)
    pos = jnp.arange(S, dtype=jnp.float32)[:, None]
    div = jnp.exp(jnp.arange(0, D, 2, dtype=jnp.float32) * (-math.log(10000.0) / D))
    pe = jnp.zeros((S, D), jnp.float32)
    pe = pe.at[:, 0::2].set(jnp.sin(pos * div))
    pe = pe.at[:, 1::2].set(jnp.cos(pos * div))

    def make_block():
        d_ff = 4 * D
        return dict(
            wq=jax.random.normal(nk(), (D, D), jnp.float32) / math.sqrt(D),
            wk=jax.random.normal(nk(), (D, D), jnp.float32) / math.sqrt(D),
            wv=jax.random.normal(nk(), (D, D), jnp.float32) / math.sqrt(D),
            wo=jax.random.normal(nk(), (D, D), jnp.float32) / math.sqrt(D),
            g1=1.0 + 0.1 * jax.random.normal(nk(), (1, D), jnp.float32),
            be1=0.1 * jax.random.normal(nk(), (1, D), jnp.float32),
            w1=jax.random.normal(nk(), (D, d_ff), jnp.float32) / math.sqrt(D),
            bf1=0.1 * jax.random.normal(nk(), (1, d_ff), jnp.float32),
            w2=jax.random.normal(nk(), (d_ff, D), jnp.float32) / math.sqrt(d_ff),
            bf2=0.1 * jax.random.normal(nk(), (1, D), jnp.float32),
            g2=1.0 + 0.1 * jax.random.normal(nk(), (1, D), jnp.float32),
            be2=0.1 * jax.random.normal(nk(), (1, D), jnp.float32),
        )

    params = dict(
        emb=emb, pe=pe,
        blocks=[make_block() for _ in range(depth)],
        w_out=jax.random.normal(nk(), (D, C), jnp.float32) / math.sqrt(D),
        b_out=0.1 * jax.random.normal(nk(), (1, C), jnp.float32),
    )

    ids = jax.random.randint(nk(), (batch, S), 0, vocab_size, dtype=jnp.int32)
    lengths = jnp.array([S, S - 2], dtype=jnp.int32)[:batch]
    key_valid = (jnp.arange(S)[None, :] < lengths[:, None]).astype(jnp.int32)   # (B, S)
    mask = jnp.broadcast_to(key_valid[:, None, None, :], (batch, H, S, S)).astype(jnp.int32)

    out = toxic_detector_forward(ids, mask, params)
    out = jax.block_until_ready(out)

    ref = reference_forward(ids, mask, params)
    assert out.shape == (batch, C), out.shape
    assert jnp.allclose(out, ref, atol=1e-4, rtol=1e-4), (out, ref)

    print("KERNEL_OK")
</pallas_src>

<mosaic_0001>
module attributes {stable_mosaic.version = 11 : i64} {
  func.func @_toxic_forward_kernel(%arg0: i32, %arg1: i32, %arg2: memref<1x8x1xi32, #tpu.memory_space<vmem>>, %arg3: memref<64x32xf32, #tpu.memory_space<vmem>>, %arg4: memref<8x32xf32, #tpu.memory_space<vmem>>, %arg5: memref<1x4x8x8xi32, #tpu.memory_space<vmem>>, %arg6: memref<2x32x32xf32, #tpu.memory_space<vmem>>, %arg7: memref<2x32x32xf32, #tpu.memory_space<vmem>>, %arg8: memref<2x32x32xf32, #tpu.memory_space<vmem>>, %arg9: memref<2x32x32xf32, #tpu.memory_space<vmem>>, %arg10: memref<2x1x32xf32, #tpu.memory_space<vmem>>, %arg11: memref<2x1x32xf32, #tpu.memory_space<vmem>>, %arg12: memref<2x32x128xf32, #tpu.memory_space<vmem>>, %arg13: memref<2x1x128xf32, #tpu.memory_space<vmem>>, %arg14: memref<2x128x32xf32, #tpu.memory_space<vmem>>, %arg15: memref<2x1x32xf32, #tpu.memory_space<vmem>>, %arg16: memref<2x1x32xf32, #tpu.memory_space<vmem>>, %arg17: memref<2x1x32xf32, #tpu.memory_space<vmem>>, %arg18: memref<32x2xf32, #tpu.memory_space<vmem>>, %arg19: memref<1x2xf32, #tpu.memory_space<vmem>>, %arg20: memref<1x1x2xf32, #tpu.memory_space<vmem>>, %arg21: memref<8x32xf32, #tpu.memory_space<vmem>>) attributes {dimension_semantics = [#tpu.dimension_semantics<parallel>, #tpu.dimension_semantics<arbitrary>], iteration_bounds = array<i64: 2, 2>, scalar_prefetch = 0 : i64, scratch_operands = 1 : i64, tpu.core_type = #tpu.core_type<tc>, window_params = [{transform_indices = @transform_0, window_bounds = array<i64: 1, 8, 1>}, {pipeline_mode = #tpu.pipeline_mode<synchronous>, transform_indices = @transform_1, window_bounds = array<i64: 64, 32>}, {pipeline_mode = #tpu.pipeline_mode<synchronous>, transform_indices = @transform_2, window_bounds = array<i64: 8, 32>}, {transform_indices = @transform_3, window_bounds = array<i64: 1, 4, 8, 8>}, {pipeline_mode = #tpu.pipeline_mode<synchronous>, transform_indices = @transform_4, window_bounds = array<i64: 2, 32, 32>}, {pipeline_mode = #tpu.pipeline_mode<synchronous>, transform_indices = @transform_5, window_bounds = array<i64: 2, 32, 32>}, {pipeline_mode = #tpu.pipeline_mode<synchronous>, transform_indices = @transform_6, window_bounds = array<i64: 2, 32, 32>}, {pipeline_mode = #tpu.pipeline_mode<synchronous>, transform_indices = @transform_7, window_bounds = array<i64: 2, 32, 32>}, {pipeline_mode = #tpu.pipeline_mode<synchronous>, transform_indices = @transform_8, window_bounds = array<i64: 2, 1, 32>}, {pipeline_mode = #tpu.pipeline_mode<synchronous>, transform_indices = @transform_9, window_bounds = array<i64: 2, 1, 32>}, {pipeline_mode = #tpu.pipeline_mode<synchronous>, transform_indices = @transform_10, window_bounds = array<i64: 2, 32, 128>}, {pipeline_mode = #tpu.pipeline_mode<synchronous>, transform_indices = @transform_11, window_bounds = array<i64: 2, 1, 128>}, {pipeline_mode = #tpu.pipeline_mode<synchronous>, transform_indices = @transform_12, window_bounds = array<i64: 2, 128, 32>}, {pipeline_mode = #tpu.pipeline_mode<synchronous>, transform_indices = @transform_13, window_bounds = array<i64: 2, 1, 32>}, {pipeline_mode = #tpu.pipeline_mode<synchronous>, transform_indices = @transform_14, window_bounds = array<i64: 2, 1, 32>}, {pipeline_mode = #tpu.pipeline_mode<synchronous>, transform_indices = @transform_15, window_bounds = array<i64: 2, 1, 32>}, {pipeline_mode = #tpu.pipeline_mode<synchronous>, transform_indices = @transform_16, window_bounds = array<i64: 32, 2>}, {pipeline_mode = #tpu.pipeline_mode<synchronous>, transform_indices = @transform_17, window_bounds = array<i64: 1, 2>}, {transform_indices = @transform_18, window_bounds = array<i64: 1, 1, 2>}]} {
    %c0_i32 = arith.constant 0 : i32
    %0 = arith.cmpi eq, %arg1, %c0_i32 : i32
    %1 = arith.extui %0 : i1 to i32
    %c0_i32_0 = arith.constant 0 : i32
    %2 = arith.cmpi ne, %1, %c0_i32_0 : i32
    scf.if %2 {
      %c0_77 = arith.constant 0 : index
      %c0_78 = arith.constant 0 : index
      %c0_79 = arith.constant 0 : index
      %193 = vector.load %arg2[%c0_77, %c0_78, %c0_79] : memref<1x8x1xi32, #tpu.memory_space<vmem>>, vector<1x8x1xi32>
      %194 = vector.shape_cast %193 : vector<1x8x1xi32> to vector<8x1xi32>
      %195 = tpu.iota {dimensions = array<i32: 1>} : vector<8x64xi32>
      %196 = vector.broadcast %194 : vector<8x1xi32> to vector<8x64xi32>
      %197 = arith.cmpi eq, %196, %195 : vector<8x64xi32>
      %198 = arith.extui %197 : vector<8x64xi1> to vector<8x64xi32>
      %199 = arith.sitofp %198 : vector<8x64xi32> to vector<8x64xf32>
      %c0_80 = arith.constant 0 : index
      %c0_81 = arith.constant 0 : index
      %200 = vector.load %arg3[%c0_80, %c0_81] : memref<64x32xf32, #tpu.memory_space<vmem>>, vector<64x32xf32>
      %cst_82 = arith.constant dense<0.000000e+00> : vector<8x32xf32>
      %201 = tpu.matmul %199, %200, %cst_82 {dimension_numbers = #tpu.dot_dimension_numbers<[1], [0], [0], [1], [0, 0, 1, 1], [], []>} : vector<8x64xf32>, vector<64x32xf32>, vector<8x32xf32> -> vector<8x32xf32>
      %cst_83 = arith.constant 5.65685415 : f32
      %202 = vector.broadcast %cst_83 : f32 to vector<8x32xf32>
      %203 = arith.mulf %201, %202 : vector<8x32xf32>
      %c0_84 = arith.constant 0 : index
      %c0_85 = arith.constant 0 : index
      %204 = vector.load %arg4[%c0_84, %c0_85] : memref<8x32xf32, #tpu.memory_space<vmem>>, vector<8x32xf32>
      %205 = arith.addf %203, %204 : vector<8x32xf32>
      %c0_86 = arith.constant 0 : index
      %c0_87 = arith.constant 0 : index
      %206 = vector.load %arg21[%c0_86, %c0_87] : memref<8x32xf32, #tpu.memory_space<vmem>>, vector<8x32xf32>
      tpu.vector_store %arg21[%c0_86, %c0_87], %205 {strides = array<i32>} : memref<8x32xf32, #tpu.memory_space<vmem>>, vector<8x32xf32>,
    } else {
    }
    %c0 = arith.constant 0 : index
    %c0_1 = arith.constant 0 : index
    %3 = vector.load %arg21[%c0, %c0_1] : memref<8x32xf32, #tpu.memory_space<vmem>>, vector<8x32xf32>
    %4 = arith.index_cast %arg1 : i32 to index
    %c0_2 = arith.constant 0 : index
    %c0_3 = arith.constant 0 : index
    %5 = vector.load %arg6[%4, %c0_2, %c0_3] : memref<2x32x32xf32, #tpu.memory_space<vmem>>, vector<1x32x32xf32>
    %6 = vector.shape_cast %5 : vector<1x32x32xf32> to vector<32x32xf32>
    %7 = arith.index_cast %arg1 : i32 to index
    %c0_4 = arith.constant 0 : index
    %c0_5 = arith.constant 0 : index
    %8 = vector.load %arg7[%7, %c0_4, %c0_5] : memref<2x32x32xf32, #tpu.memory_space<vmem>>, vector<1x32x32xf32>
    %9 = vector.shape_cast %8 : vector<1x32x32xf32> to vector<32x32xf32>
    %10 = arith.index_cast %arg1 : i32 to index
    %c0_6 = arith.constant 0 : index
    %c0_7 = arith.constant 0 : index
    %11 = vector.load %arg8[%10, %c0_6, %c0_7] : memref<2x32x32xf32, #tpu.memory_space<vmem>>, vector<1x32x32xf32>
    %12 = vector.shape_cast %11 : vector<1x32x32xf32> to vector<32x32xf32>
    %13 = arith.index_cast %arg1 : i32 to index
    %c0_8 = arith.constant 0 : index
    %c0_9 = arith.constant 0 : index
    %14 = vector.load %arg9[%13, %c0_8, %c0_9] : memref<2x32x32xf32, #tpu.memory_space<vmem>>, vector<1x32x32xf32>
    %15 = vector.shape_cast %14 : vector<1x32x32xf32> to vector<32x32xf32>
    %cst = arith.constant dense<0.000000e+00> : vector<8x32xf32>
    %16 = tpu.matmul %3, %6, %cst {dimension_numbers = #tpu.dot_dimension_numbers<[1], [0], [0], [1], [0, 0, 1, 1], [], []>} : vector<8x32xf32>, vector<32x32xf32>, vector<8x32xf32> -> vector<8x32xf32>
    %cst_10 = arith.constant dense<0.000000e+00> : vector<8x32xf32>
    %17 = tpu.matmul %3, %9, %cst_10 {dimension_numbers = #tpu.dot_dimension_numbers<[1], [0], [0], [1], [0, 0, 1, 1], [], []>} : vector<8x32xf32>, vector<32x32xf32>, vector<8x32xf32> -> vector<8x32xf32>
    %cst_11 = arith.constant dense<0.000000e+00> : vector<8x32xf32>
    %18 = tpu.matmul %3, %12, %cst_11 {dimension_numbers = #tpu.dot_dimension_numbers<[1], [0], [0], [1], [0, 0, 1, 1], [], []>} : vector<8x32xf32>, vector<32x32xf32>, vector<8x32xf32> -> vector<8x32xf32>
    %c0_12 = arith.constant 0 : index
    %c0_13 = arith.constant 0 : index
    %c0_14 = arith.constant 0 : index
    %c0_15 = arith.constant 0 : index
    %19 = vector.load %arg5[%c0_12, %c0_13, %c0_14, %c0_15] : memref<1x4x8x8xi32, #tpu.memory_space<vmem>>, vector<1x4x8x8xi32>
    %20 = vector.shape_cast %19 : vector<1x4x8x8xi32> to vector<4x8x8xi32>
    %21 = vector.extract_strided_slice %16 {offsets = [0, 0], sizes = [8, 8], strides = [1, 1]} : vector<8x32xf32> to vector<8x8xf32>
    %22 = vector.extract_strided_slice %17 {offsets = [0, 0], sizes = [8, 8], strides = [1, 1]} : vector<8x32xf32> to vector<8x8xf32>
    %23 = vector.extract_strided_slice %18 {offsets = [0, 0], sizes = [8, 8], strides = [1, 1]} : vector<8x32xf32> to vector<8x8xf32>
    %cst_16 = arith.constant dense<0.000000e+00> : vector<8x8xf32>
    %24 = tpu.matmul %21, %22, %cst_16 {dimension_numbers = #tpu.dot_dimension_numbers<[1], [1], [0], [0], [0, 0, 1, 0], [], []>} : vector<8x8xf32>, vector<8x8xf32>, vector<8x8xf32> -> vector<8x8xf32>
    %cst_17 = arith.constant 0.176776692 : f32
    %25 = vector.broadcast %cst_17 : f32 to vector<8x8xf32>
    %26 = arith.mulf %24, %25 : vector<8x8xf32>
    %27 = vector.extract_strided_slice %20 {offsets = [0, 0, 0], sizes = [1, 8, 8], strides = [1, 1, 1]} : vector<4x8x8xi32> to vector<1x8x8xi32>
    %28 = vector.shape_cast %27 : vector<1x8x8xi32> to vector<8x8xi32>
    %c0_i32_18 = arith.constant 0 : i32
    %29 = vector.broadcast %c0_i32_18 : i32 to vector<8x8xi32>
    %30 = arith.cmpi eq, %28, %29 : vector<8x8xi32>
    %cst_19 = arith.constant -1.000000e+30 : f32
    %31 = vector.broadcast %cst_19 : f32 to vector<8x8xf32>
    %32 = arith.select %30, %31, %26 : vector<8x8xi1>, vector<8x8xf32>
    %cst_20 = arith.constant dense<0xFF800000> : vector<8xf32>
    %33 = vector.multi_reduction <maximumf>, %32, %cst_20 [1] : vector<8x8xf32> to vector<8xf32>
    %34 = vector.shape_cast %33 : vector<8xf32> to vector<8x1xf32>
    %35 = vector.broadcast %34 : vector<8x1xf32> to vector<8x8xf32>
    %36 = arith.subf %32, %35 : vector<8x8xf32>
    %37 = math.exp %36 : vector<8x8xf32>
    %cst_21 = arith.constant dense<0.000000e+00> : vector<8xf32>
    %38 = vector.multi_reduction <add>, %37, %cst_21 [1] : vector<8x8xf32> to vector<8xf32>
    %39 = vector.shape_cast %38 : vector<8xf32> to vector<8x1xf32>
    %40 = vector.broadcast %39 : vector<8x1xf32> to vector<8x8xf32>
    %41 = arith.divf %37, %40 : vector<8x8xf32>
    %cst_22 = arith.constant dense<0.000000e+00> : vector<8x8xf32>
    %42 = tpu.matmul %41, %23, %cst_22 {dimension_numbers = #tpu.dot_dimension_numbers<[1], [0], [0], [1], [0, 0, 1, 1], [], []>} : vector<8x8xf32>, vector<8x8xf32>, vector<8x8xf32> -> vector<8x8xf32>
    %43 = vector.extract_strided_slice %16 {offsets = [0, 8], sizes = [8, 8], strides = [1, 1]} : vector<8x32xf32> to vector<8x8xf32>
    %44 = vector.extract_strided_slice %17 {offsets = [0, 8], sizes = [8, 8], strides = [1, 1]} : vector<8x32xf32> to vector<8x8xf32>
    %45 = vector.extract_strided_slice %18 {offsets = [0, 8], sizes = [8, 8], strides = [1, 1]} : vector<8x32xf32> to vector<8x8xf32>
    %cst_23 = arith.constant dense<0.000000e+00> : vector<8x8xf32>
    %46 = tpu.matmul %43, %44, %cst_23 {dimension_numbers = #tpu.dot_dimension_numbers<[1], [1], [0], [0], [0, 0, 1, 0], [], []>} : vector<8x8xf32>, vector<8x8xf32>, vector<8x8xf32> -> vector<8x8xf32>
    %cst_24 = arith.constant 0.176776692 : f32
    %47 = vector.broadcast %cst_24 : f32 to vector<8x8xf32>
    %48 = arith.mulf %46, %47 : vector<8x8xf32>
    %49 = vector.extract_strided_slice %20 {offsets = [1, 0, 0], sizes = [1, 8, 8], strides = [1, 1, 1]} : vector<4x8x8xi32> to vector<1x8x8xi32>
    %50 = vector.shape_cast %49 : vector<1x8x8xi32> to vector<8x8xi32>
    %c0_i32_25 = arith.constant 0 : i32
    %51 = vector.broadcast %c0_i32_25 : i32 to vector<8x8xi32>
    %52 = arith.cmpi eq, %50, %51 : vector<8x8xi32>
    %cst_26 = arith.constant -1.000000e+30 : f32
    %53 = vector.broadcast %cst_26 : f32 to vector<8x8xf32>
    %54 = arith.select %52, %53, %48 : vector<8x8xi1>, vector<8x8xf32>
    %cst_27 = arith.constant dense<0xFF800000> : vector<8xf32>
    %55 = vector.multi_reduction <maximumf>, %54, %cst_27 [1] : vector<8x8xf32> to vector<8xf32>
    %56 = vector.shape_cast %55 : vector<8xf32> to vector<8x1xf32>
    %57 = vector.broadcast %56 : vector<8x1xf32> to vector<8x8xf32>
    %58 = arith.subf %54, %57 : vector<8x8xf32>
    %59 = math.exp %58 : vector<8x8xf32>
    %cst_28 = arith.constant dense<0.000000e+00> : vector<8xf32>
    %60 = vector.multi_reduction <add>, %59, %cst_28 [1] : vector<8x8xf32> to vector<8xf32>
    %61 = vector.shape_cast %60 : vector<8xf32> to vector<8x1xf32>
    %62 = vector.broadcast %61 : vector<8x1xf32> to vector<8x8xf32>
    %63 = arith.divf %59, %62 : vector<8x8xf32>
    %cst_29 = arith.constant dense<0.000000e+00> : vector<8x8xf32>
    %64 = tpu.matmul %63, %45, %cst_29 {dimension_numbers = #tpu.dot_dimension_numbers<[1], [0], [0], [1], [0, 0, 1, 1], [], []>} : vector<8x8xf32>, vector<8x8xf32>, vector<8x8xf32> -> vector<8x8xf32>
    %65 = vector.extract_strided_slice %16 {offsets = [0, 16], sizes = [8, 8], strides = [1, 1]} : vector<8x32xf32> to vector<8x8xf32>
    %66 = vector.extract_strided_slice %17 {offsets = [0, 16], sizes = [8, 8], strides = [1, 1]} : vector<8x32xf32> to vector<8x8xf32>
    %67 = vector.extract_strided_slice %18 {offsets = [0, 16], sizes = [8, 8], strides = [1, 1]} : vector<8x32xf32> to vector<8x8xf32>
    %cst_30 = arith.constant dense<0.000000e+00> : vector<8x8xf32>
    %68 = tpu.matmul %65, %66, %cst_30 {dimension_numbers = #tpu.dot_dimension_numbers<[1], [1], [0], [0], [0, 0, 1, 0], [], []>} : vector<8x8xf32>, vector<8x8xf32>, vector<8x8xf32> -> vector<8x8xf32>
    %cst_31 = arith.constant 0.176776692 : f32
    %69 = vector.broadcast %cst_31 : f32 to vector<8x8xf32>
    %70 = arith.mulf %68, %69 : vector<8x8xf32>
    %71 = vector.extract_strided_slice %20 {offsets = [2, 0, 0], sizes = [1, 8, 8], strides = [1, 1, 1]} : vector<4x8x8xi32> to vector<1x8x8xi32>
    %72 = vector.shape_cast %71 : vector<1x8x8xi32> to vector<8x8xi32>
    %c0_i32_32 = arith.constant 0 : i32
    %73 = vector.broadcast %c0_i32_32 : i32 to vector<8x8xi32>
    %74 = arith.cmpi eq, %72, %73 : vector<8x8xi32>
    %cst_33 = arith.constant -1.000000e+30 : f32
    %75 = vector.broadcast %cst_33 : f32 to vector<8x8xf32>
    %76 = arith.select %74, %75, %70 : vector<8x8xi1>, vector<8x8xf32>
    %cst_34 = arith.constant dense<0xFF800000> : vector<8xf32>
    %77 = vector.multi_reduction <maximumf>, %76, %cst_34 [1] : vector<8x8xf32> to vector<8xf32>
    %78 = vector.shape_cast %77 : vector<8xf32> to vector<8x1xf32>
    %79 = vector.broadcast %78 : vector<8x1xf32> to vector<8x8xf32>
    %80 = arith.subf %76, %79 : vector<8x8xf32>
    %81 = math.exp %80 : vector<8x8xf32>
    %cst_35 = arith.constant dense<0.000000e+00> : vector<8xf32>
    %82 = vector.multi_reduction <add>, %81, %cst_35 [1] : vector<8x8xf32> to vector<8xf32>
    %83 = vector.shape_cast %82 : vector<8xf32> to vector<8x1xf32>
    %84 = vector.broadcast %83 : vector<8x1xf32> to vector<8x8xf32>
    %85 = arith.divf %81, %84 : vector<8x8xf32>
    %cst_36 = arith.constant dense<0.000000e+00> : vector<8x8xf32>
    %86 = tpu.matmul %85, %67, %cst_36 {dimension_numbers = #tpu.dot_dimension_numbers<[1], [0], [0], [1], [0, 0, 1, 1], [], []>} : vector<8x8xf32>, vector<8x8xf32>, vector<8x8xf32> -> vector<8x8xf32>
    %87 = vector.extract_strided_slice %16 {offsets = [0, 24], sizes = [8, 8], strides = [1, 1]} : vector<8x32xf32> to vector<8x8xf32>
    %88 = vector.extract_strided_slice %17 {offsets = [0, 24], sizes = [8, 8], strides = [1, 1]} : vector<8x32xf32> to vector<8x8xf32>
    %89 = vector.extract_strided_slice %18 {offsets = [0, 24], sizes = [8, 8], strides = [1, 1]} : vector<8x32xf32> to vector<8x8xf32>
    %cst_37 = arith.constant dense<0.000000e+00> : vector<8x8xf32>
    %90 = tpu.matmul %87, %88, %cst_37 {dimension_numbers = #tpu.dot_dimension_numbers<[1], [1], [0], [0], [0, 0, 1, 0], [], []>} : vector<8x8xf32>, vector<8x8xf32>, vector<8x8xf32> -> vector<8x8xf32>
    %cst_38 = arith.constant 0.176776692 : f32
    %91 = vector.broadcast %cst_38 : f32 to vector<8x8xf32>
    %92 = arith.mulf %90, %91 : vector<8x8xf32>
    %93 = vector.extract_strided_slice %20 {offsets = [3, 0, 0], sizes = [1, 8, 8], strides = [1, 1, 1]} : vector<4x8x8xi32> to vector<1x8x8xi32>
    %94 = vector.shape_cast %93 : vector<1x8x8xi32> to vector<8x8xi32>
    %c0_i32_39 = arith.constant 0 : i32
    %95 = vector.broadcast %c0_i32_39 : i32 to vector<8x8xi32>
    %96 = arith.cmpi eq, %94, %95 : vector<8x8xi32>
    %cst_40 = arith.constant -1.000000e+30 : f32
    %97 = vector.broadcast %cst_40 : f32 to vector<8x8xf32>
    %98 = arith.select %96, %97, %92 : vector<8x8xi1>, vector<8x8xf32>
    %cst_41 = arith.constant dense<0xFF800000> : vector<8xf32>
    %99 = vector.multi_reduction <maximumf>, %98, %cst_41 [1] : vector<8x8xf32> to vector<8xf32>
    %100 = vector.shape_cast %99 : vector<8xf32> to vector<8x1xf32>
    %101 = vector.broadcast %100 : vector<8x1xf32> to vector<8x8xf32>
    %102 = arith.subf %98, %101 : vector<8x8xf32>
    %103 = math.exp %102 : vector<8x8xf32>
    %cst_42 = arith.constant dense<0.000000e+00> : vector<8xf32>
    %104 = vector.multi_reduction <add>, %103, %cst_42 [1] : vector<8x8xf32> to vector<8xf32>
    %105 = vector.shape_cast %104 : vector<8xf32> to vector<8x1xf32>
    %106 = vector.broadcast %105 : vector<8x1xf32> to vector<8x8xf32>
    %107 = arith.divf %103, %106 : vector<8x8xf32>
    %cst_43 = arith.constant dense<0.000000e+00> : vector<8x8xf32>
    %108 = tpu.matmul %107, %89, %cst_43 {dimension_numbers = #tpu.dot_dimension_numbers<[1], [0], [0], [1], [0, 0, 1, 1], [], []>} : vector<8x8xf32>, vector<8x8xf32>, vector<8x8xf32> -> vector<8x8xf32>
    %109 = tpu.concatenate %42, %64, %86, %108 in 1 : vector<8x8xf32>, vector<8x8xf32>, vector<8x8xf32>, vector<8x8xf32> -> vector<8x32xf32>
    %cst_44 = arith.constant dense<0.000000e+00> : vector<8x32xf32>
    %110 = tpu.matmul %109, %15, %cst_44 {dimension_numbers = #tpu.dot_dimension_numbers<[1], [0], [0], [1], [0, 0, 1, 1], [], []>} : vector<8x32xf32>, vector<32x32xf32>, vector<8x32xf32> -> vector<8x32xf32>
    %111 = arith.addf %3, %110 : vector<8x32xf32>
    %cst_45 = arith.constant dense<0.000000e+00> : vector<8xf32>
    %112 = vector.multi_reduction <add>, %111, %cst_45 [1] : vector<8x32xf32> to vector<8xf32>
    %113 = vector.shape_cast %112 : vector<8xf32> to vector<8x1xf32>
    %cst_46 = arith.constant 3.200000e+01 : f32
    %114 = vector.broadcast %cst_46 : f32 to vector<8x1xf32>
    %115 = arith.divf %113, %114 : vector<8x1xf32>
    %116 = vector.broadcast %115 : vector<8x1xf32> to vector<8x32xf32>
    %117 = arith.subf %111, %116 : vector<8x32xf32>
    %118 = arith.mulf %117, %117 : vector<8x32xf32>
    %cst_47 = arith.constant dense<0.000000e+00> : vector<8xf32>
    %119 = vector.multi_reduction <add>, %118, %cst_47 [1] : vector<8x32xf32> to vector<8xf32>
    %120 = vector.shape_cast %119 : vector<8xf32> to vector<8x1xf32>
    %cst_48 = arith.constant 3.200000e+01 : f32
    %121 = vector.broadcast %cst_48 : f32 to vector<8x1xf32>
    %122 = arith.divf %120, %121 : vector<8x1xf32>
    %123 = vector.broadcast %115 : vector<8x1xf32> to vector<8x32xf32>
    %124 = arith.subf %111, %123 : vector<8x32xf32>
    %cst_49 = arith.constant 9.99999974E-6 : f32
    %125 = vector.broadcast %cst_49 : f32 to vector<8x1xf32>
    %126 = arith.addf %122, %125 : vector<8x1xf32>
    %127 = math.rsqrt %126 : vector<8x1xf32>
    %128 = vector.broadcast %127 : vector<8x1xf32> to vector<8x32xf32>
    %129 = arith.mulf %124, %128 : vector<8x32xf32>
    %130 = arith.index_cast %arg1 : i32 to index
    %c0_50 = arith.constant 0 : index
    %c0_51 = arith.constant 0 : index
    %131 = vector.load %arg10[%130, %c0_50, %c0_51] : memref<2x1x32xf32, #tpu.memory_space<vmem>>, vector<1x1x32xf32>
    %132 = vector.shape_cast %131 : vector<1x1x32xf32> to vector<1x32xf32>
    %133 = vector.broadcast %132 : vector<1x32xf32> to vector<8x32xf32>
    %134 = arith.mulf %129, %133 : vector<8x32xf32>
    %135 = arith.index_cast %arg1 : i32 to index
    %c0_52 = arith.constant 0 : index
    %c0_53 = arith.constant 0 : index
    %136 = vector.load %arg11[%135, %c0_52, %c0_53] : memref<2x1x32xf32, #tpu.memory_space<vmem>>, vector<1x1x32xf32>
    %137 = vector.shape_cast %136 : vector<1x1x32xf32> to vector<1x32xf32>
    %138 = vector.broadcast %137 : vector<1x32xf32> to vector<8x32xf32>
    %139 = arith.addf %134, %138 : vector<8x32xf32>
    %140 = arith.index_cast %arg1 : i32 to index
    %c0_54 = arith.constant 0 : index
    %c0_55 = arith.constant 0 : index
    %141 = vector.load %arg12[%140, %c0_54, %c0_55] : memref<2x32x128xf32, #tpu.memory_space<vmem>>, vector<1x32x128xf32>
    %142 = vector.shape_cast %141 : vector<1x32x128xf32> to vector<32x128xf32>
    %cst_56 = arith.constant dense<0.000000e+00> : vector<8x128xf32>
    %143 = tpu.matmul %139, %142, %cst_56 {dimension_numbers = #tpu.dot_dimension_numbers<[1], [0], [0], [1], [0, 0, 1, 1], [], []>} : vector<8x32xf32>, vector<32x128xf32>, vector<8x128xf32> -> vector<8x128xf32>
    %144 = arith.index_cast %arg1 : i32 to index
    %c0_57 = arith.constant 0 : index
    %c0_58 = arith.constant 0 : index
    %145 = vector.load %arg13[%144, %c0_57, %c0_58] : memref<2x1x128xf32, #tpu.memory_space<vmem>>, vector<1x1x128xf32>
    %146 = vector.shape_cast %145 : vector<1x1x128xf32> to vector<1x128xf32>
    %147 = vector.broadcast %146 : vector<1x128xf32> to vector<8x128xf32>
    %148 = arith.addf %143, %147 : vector<8x128xf32>
    %cst_59 = arith.constant 0.000000e+00 : f32
    %149 = vector.broadcast %cst_59 : f32 to vector<8x128xf32>
    %150 = arith.maximumf %148, %149 : vector<8x128xf32>
    %151 = arith.index_cast %arg1 : i32 to index
    %c0_60 = arith.constant 0 : index
    %c0_61 = arith.constant 0 : index
    %152 = vector.load %arg14[%151, %c0_60, %c0_61] : memref<2x128x32xf32, #tpu.memory_space<vmem>>, vector<1x128x32xf32>
    %153 = vector.shape_cast %152 : vector<1x128x32xf32> to vector<128x32xf32>
    %cst_62 = arith.constant dense<0.000000e+00> : vector<8x32xf32>
    %154 = tpu.matmul %150, %153, %cst_62 {dimension_numbers = #tpu.dot_dimension_numbers<[1], [0], [0], [1], [0, 0, 1, 1], [], []>} : vector<8x128xf32>, vector<128x32xf32>, vector<8x32xf32> -> vector<8x32xf32>
    %155 = arith.index_cast %arg1 : i32 to index
    %c0_63 = arith.constant 0 : index
    %c0_64 = arith.constant 0 : index
    %156 = vector.load %arg15[%155, %c0_63, %c0_64] : memref<2x1x32xf32, #tpu.memory_space<vmem>>, vector<1x1x32xf32>
    %157 = vector.shape_cast %156 : vector<1x1x32xf32> to vector<1x32xf32>
    %158 = vector.broadcast %157 : vector<1x32xf32> to vector<8x32xf32>
    %159 = arith.addf %154, %158 : vector<8x32xf32>
    %160 = arith.addf %139, %159 : vector<8x32xf32>
    %cst_65 = arith.constant dense<0.000000e+00> : vector<8xf32>
    %161 = vector.multi_reduction <add>, %160, %cst_65 [1] : vector<8x32xf32> to vector<8xf32>
    %162 = vector.shape_cast %161 : vector<8xf32> to vector<8x1xf32>
    %cst_66 = arith.constant 3.200000e+01 : f32
    %163 = vector.broadcast %cst_66 : f32 to vector<8x1xf32>
    %164 = arith.divf %162, %163 : vector<8x1xf32>
    %165 = vector.broadcast %164 : vector<8x1xf32> to vector<8x32xf32>
    %166 = arith.subf %160, %165 : vector<8x32xf32>
    %167 = arith.mulf %166, %166 : vector<8x32xf32>
    %cst_67 = arith.constant dense<0.000000e+00> : vector<8xf32>
    %168 = vector.multi_reduction <add>, %167, %cst_67 [1] : vector<8x32xf32> to vector<8xf32>
    %169 = vector.shape_cast %168 : vector<8xf32> to vector<8x1xf32>
    %cst_68 = arith.constant 3.200000e+01 : f32
    %170 = vector.broadcast %cst_68 : f32 to vector<8x1xf32>
    %171 = arith.divf %169, %170 : vector<8x1xf32>
    %172 = vector.broadcast %164 : vector<8x1xf32> to vector<8x32xf32>
    %173 = arith.subf %160, %172 : vector<8x32xf32>
    %cst_69 = arith.constant 9.99999974E-6 : f32
    %174 = vector.broadcast %cst_69 : f32 to vector<8x1xf32>
    %175 = arith.addf %171, %174 : vector<8x1xf32>
    %176 = math.rsqrt %175 : vector<8x1xf32>
    %177 = vector.broadcast %176 : vector<8x1xf32> to vector<8x32xf32>
    %178 = arith.mulf %173, %177 : vector<8x32xf32>
    %179 = arith.index_cast %arg1 : i32 to index
    %c0_70 = arith.constant 0 : index
    %c0_71 = arith.constant 0 : index
    %180 = vector.load %arg16[%179, %c0_70, %c0_71] : memref<2x1x32xf32, #tpu.memory_space<vmem>>, vector<1x1x32xf32>
    %181 = vector.shape_cast %180 : vector<1x1x32xf32> to vector<1x32xf32>
    %182 = vector.broadcast %181 : vector<1x32xf32> to vector<8x32xf32>
    %183 = arith.mulf %178, %182 : vector<8x32xf32>
    %184 = arith.index_cast %arg1 : i32 to index
    %c0_72 = arith.constant 0 : index
    %c0_73 = arith.constant 0 : index
    %185 = vector.load %arg17[%184, %c0_72, %c0_73] : memref<2x1x32xf32, #tpu.memory_space<vmem>>, vector<1x1x32xf32>
    %186 = vector.shape_cast %185 : vector<1x1x32xf32> to vector<1x32xf32>
    %187 = vector.broadcast %186 : vector<1x32xf32> to vector<8x32xf32>
    %188 = arith.addf %183, %187 : vector<8x32xf32>
    %c0_74 = arith.constant 0 : index
    %c0_75 = arith.constant 0 : index
    %189 = vector.load %arg21[%c0_74, %c0_75] : memref<8x32xf32, #tpu.memory_space<vmem>>, vector<8x32xf32>
    tpu.vector_store %arg21[%c0_74, %c0_75], %188 {strides = array<i32>} : memref<8x32xf32, #tpu.memory_space<vmem>>, vector<8x32xf32>,
    %c1_i32 = arith.constant 1 : i32
    %190 = arith.cmpi eq, %arg1, %c1_i32 : i32
    %191 = arith.extui %190 : i1 to i32
    %c0_i32_76 = arith.constant 0 : i32
    %192 = arith.cmpi ne, %191, %c0_i32_76 : i32
    scf.if %192 {
      %cst_77 = arith.constant dense<0.000000e+00> : vector<32xf32>
      %193 = vector.multi_reduction <add>, %188, %cst_77 [0] : vector<8x32xf32> to vector<32xf32>
      %194 = vector.shape_cast %193 : vector<32xf32> to vector<1x32xf32>
      %cst_78 = arith.constant 1.250000e-01 : f32
      %195 = vector.broadcast %cst_78 : f32 to vector<1x32xf32>
      %196 = arith.mulf %194, %195 : vector<1x32xf32>
      %c0_79 = arith.constant 0 : index
      %c0_80 = arith.constant 0 : index
      %197 = vector.load %arg18[%c0_79, %c0_80] : memref<32x2xf32, #tpu.memory_space<vmem>>, vector<32x2xf32>
      %cst_81 = arith.constant dense<0.000000e+00> : vector<1x2xf32>
      %198 = tpu.matmul %196, %197, %cst_81 {dimension_numbers = #tpu.dot_dimension_numbers<[1], [0], [0], [1], [0, 0, 1, 1], [], []>} : vector<1x32xf32>, vector<32x2xf32>, vector<1x2xf32> -> vector<1x2xf32>
      %c0_82 = arith.constant 0 : index
      %c0_83 = arith.constant 0 : index
      %199 = vector.load %arg19[%c0_82, %c0_83] : memref<1x2xf32, #tpu.memory_space<vmem>>, vector<1x2xf32>
      %200 = arith.addf %198, %199 : vector<1x2xf32>
      %cst_84 = arith.constant dense<0xFF800000> : vector<1xf32>
      %201 = vector.multi_reduction <maximumf>, %200, %cst_84 [1] : vector<1x2xf32> to vector<1xf32>
      %202 = vector.shape_cast %201 : vector<1xf32> to vector<1x1xf32>
      %203 = vector.broadcast %202 : vector<1x1xf32> to vector<1x2xf32>
      %204 = arith.subf %200, %203 : vector<1x2xf32>
      %205 = math.exp %204 : vector<1x2xf32>
      %cst_85 = arith.constant dense<0.000000e+00> : vector<1xf32>
      %206 = vector.multi_reduction <add>, %205, %cst_85 [1] : vector<1x2xf32> to vector<1xf32>
      %207 = vector.shape_cast %206 : vector<1xf32> to vector<1x1xf32>
      %208 = math.log %207 : vector<1x1xf32>
      %209 = vector.broadcast %208 : vector<1x1xf32> to vector<1x2xf32>
      %210 = arith.subf %204, %209 : vector<1x2xf32>
      %211 = vector.shape_cast %210 : vector<1x2xf32> to vector<1x1x2xf32>
      %c0_86 = arith.constant 0 : index
      %c0_87 = arith.constant 0 : index
      %c0_88 = arith.constant 0 : index
      %212 = vector.load %arg20[%c0_86, %c0_87, %c0_88] : memref<1x1x2xf32, #tpu.memory_space<vmem>>, vector<1x1x2xf32>
      tpu.vector_store %arg20[%c0_86, %c0_87, %c0_88], %211 {strides = array<i32>} : memref<1x1x2xf32, #tpu.memory_space<vmem>>, vector<1x1x2xf32>,
    } else {
    }
    return
  }
  func.func @transform_0(%arg0: i32, %arg1: i32) -> (i32, i32, i32) {
    %c0_i32 = arith.constant 0 : i32
    %c0_i32_0 = arith.constant 0 : i32
    %c0_i32_1 = arith.constant 0 : i32
    return %arg0, %c0_i32, %c0_i32_0 : i32, i32, i32
  }
  func.func @transform_1(%arg0: i32, %arg1: i32) -> (i32, i32) {
    %c0_i32 = arith.constant 0 : i32
    %c0_i32_0 = arith.constant 0 : i32
    %c0_i32_1 = arith.constant 0 : i32
    return %c0_i32, %c0_i32_0 : i32, i32
  }
  func.func @transform_2(%arg0: i32, %arg1: i32) -> (i32, i32) {
    %c0_i32 = arith.constant 0 : i32
    %c0_i32_0 = arith.constant 0 : i32
    %c0_i32_1 = arith.constant 0 : i32
    return %c0_i32, %c0_i32_0 : i32, i32
  }
  func.func @transform_3(%arg0: i32, %arg1: i32) -> (i32, i32, i32, i32) {
    %c0_i32 = arith.constant 0 : i32
    %c0_i32_0 = arith.constant 0 : i32
    %c0_i32_1 = arith.constant 0 : i32
    %c0_i32_2 = arith.constant 0 : i32
    return %arg0, %c0_i32, %c0_i32_0, %c0_i32_1 : i32, i32, i32, i32
  }
  func.func @transform_4(%arg0: i32, %arg1: i32) -> (i32, i32, i32) {
    %c0_i32 = arith.constant 0 : i32
    %c0_i32_0 = arith.constant 0 : i32
    %c0_i32_1 = arith.constant 0 : i32
    %c0_i32_2 = arith.constant 0 : i32
    return %c0_i32, %c0_i32_0, %c0_i32_1 : i32, i32, i32
  }
  func.func @transform_5(%arg0: i32, %arg1: i32) -> (i32, i32, i32) {
    %c0_i32 = arith.constant 0 : i32
    %c0_i32_0 = arith.constant 0 : i32
    %c0_i32_1 = arith.constant 0 : i32
    %c0_i32_2 = arith.constant 0 : i32
    return %c0_i32, %c0_i32_0, %c0_i32_1 : i32, i32, i32
  }
  func.func @transform_6(%arg0: i32, %arg1: i32) -> (i32, i32, i32) {
    %c0_i32 = arith.constant 0 : i32
    %c0_i32_0 = arith.constant 0 : i32
    %c0_i32_1 = arith.constant 0 : i32
    %c0_i32_2 = arith.constant 0 : i32
    return %c0_i32, %c0_i32_0, %c0_i32_1 : i32, i32, i32
  }
  func.func @transform_7(%arg0: i32, %arg1: i32) -> (i32, i32, i32) {
    %c0_i32 = arith.constant 0 : i32
    %c0_i32_0 = arith.constant 0 : i32
    %c0_i32_1 = arith.constant 0 : i32
    %c0_i32_2 = arith.constant 0 : i32
    return %c0_i32, %c0_i32_0, %c0_i32_1 : i32, i32, i32
  }
  func.func @transform_8(%arg0: i32, %arg1: i32) -> (i32, i32, i32) {
    %c0_i32 = arith.constant 0 : i32
    %c0_i32_0 = arith.constant 0 : i32
    %c0_i32_1 = arith.constant 0 : i32
    %c0_i32_2 = arith.constant 0 : i32
    return %c0_i32, %c0_i32_0, %c0_i32_1 : i32, i32, i32
  }
  func.func @transform_9(%arg0: i32, %arg1: i32) -> (i32, i32, i32) {
    %c0_i32 = arith.constant 0 : i32
    %c0_i32_0 = arith.constant 0 : i32
    %c0_i32_1 = arith.constant 0 : i32
    %c0_i32_2 = arith.constant 0 : i32
    return %c0_i32, %c0_i32_0, %c0_i32_1 : i32, i32, i32
  }
  func.func @transform_10(%arg0: i32, %arg1: i32) -> (i32, i32, i32) {
    %c0_i32 = arith.constant 0 : i32
    %c0_i32_0 = arith.constant 0 : i32
    %c0_i32_1 = arith.constant 0 : i32
    %c0_i32_2 = arith.constant 0 : i32
    return %c0_i32, %c0_i32_0, %c0_i32_1 : i32, i32, i32
  }
  func.func @transform_11(%arg0: i32, %arg1: i32) -> (i32, i32, i32) {
    %c0_i32 = arith.constant 0 : i32
    %c0_i32_0 = arith.constant 0 : i32
    %c0_i32_1 = arith.constant 0 : i32
    %c0_i32_2 = arith.constant 0 : i32
    return %c0_i32, %c0_i32_0, %c0_i32_1 : i32, i32, i32
  }
  func.func @transform_12(%arg0: i32, %arg1: i32) -> (i32, i32, i32) {
    %c0_i32 = arith.constant 0 : i32
    %c0_i32_0 = arith.constant 0 : i32
    %c0_i32_1 = arith.constant 0 : i32
    %c0_i32_2 = arith.constant 0 : i32
    return %c0_i32, %c0_i32_0, %c0_i32_1 : i32, i32, i32
  }
  func.func @transform_13(%arg0: i32, %arg1: i32) -> (i32, i32, i32) {
    %c0_i32 = arith.constant 0 : i32
    %c0_i32_0 = arith.constant 0 : i32
    %c0_i32_1 = arith.constant 0 : i32
    %c0_i32_2 = arith.constant 0 : i32
    return %c0_i32, %c0_i32_0, %c0_i32_1 : i32, i32, i32
  }
  func.func @transform_14(%arg0: i32, %arg1: i32) -> (i32, i32, i32) {
    %c0_i32 = arith.constant 0 : i32
    %c0_i32_0 = arith.constant 0 : i32
    %c0_i32_1 = arith.constant 0 : i32
    %c0_i32_2 = arith.constant 0 : i32
    return %c0_i32, %c0_i32_0, %c0_i32_1 : i32, i32, i32
  }
  func.func @transform_15(%arg0: i32, %arg1: i32) -> (i32, i32, i32) {
    %c0_i32 = arith.constant 0 : i32
    %c0_i32_0 = arith.constant 0 : i32
    %c0_i32_1 = arith.constant 0 : i32
    %c0_i32_2 = arith.constant 0 : i32
    return %c0_i32, %c0_i32_0, %c0_i32_1 : i32, i32, i32
  }
  func.func @transform_16(%arg0: i32, %arg1: i32) -> (i32, i32) {
    %c0_i32 = arith.constant 0 : i32
    %c0_i32_0 = arith.constant 0 : i32
    %c0_i32_1 = arith.constant 0 : i32
    return %c0_i32, %c0_i32_0 : i32, i32
  }
  func.func @transform_17(%arg0: i32, %arg1: i32) -> (i32, i32) {
    %c0_i32 = arith.constant 0 : i32
    %c0_i32_0 = arith.constant 0 : i32
    %c0_i32_1 = arith.constant 0 : i32
    return %c0_i32, %c0_i32_0 : i32, i32
  }
  func.func @transform_18(%arg0: i32, %arg1: i32) -> (i32, i32, i32) {
    %c0_i32 = arith.constant 0 : i32
    %c0_i32_0 = arith.constant 0 : i32
    %c0_i32_1 = arith.constant 0 : i32
    return %arg0, %c0_i32, %c0_i32_0 : i32, i32, i32
  }
}

</mosaic_0001>

<llo_original>
// kernel: tpu_custom_call.1
$region0: #{tpu_custom_call.1}
  #allocation0 [shape = 'u32[]', space=smem, size = 0x4, offset = 0x4, fixed_abs, tag = 'smem constant byte address 0x4 - core index']
  #allocation1 [shape = 'u32[72,128]{1,0:T(1,128)}', space=vmem, size = 0x9000, scoped, tag = 'internal scratch']
  #allocation2 [shape = 'f32[8,32]{1,0:T(8,128)}', space=vmem, size = 0x1000, scoped, tag = 'scratch operand']
  %s0 = inlined_call_operand.vmem [shape: s32[2,8,1], index: 0, kind: input, shape index: {}]
  %s1 = inlined_call_operand.vmem [shape: f32[64,32], index: 1, kind: input, shape index: {}]
  %s2 = inlined_call_operand.vmem [shape: f32[8,32], index: 2, kind: input, shape index: {}]
  %s3 = inlined_call_operand.vmem [shape: s32[2,4,8,8], index: 3, kind: input, shape index: {}]
  %s4 = inlined_call_operand.vmem [shape: f32[2,32,32], index: 4, kind: input, shape index: {}]
  %s5 = inlined_call_operand.vmem [shape: f32[2,32,32], index: 5, kind: input, shape index: {}]
  %s6 = inlined_call_operand.vmem [shape: f32[2,32,32], index: 6, kind: input, shape index: {}]
  %s7 = inlined_call_operand.vmem [shape: f32[2,32,32], index: 7, kind: input, shape index: {}]
  %s8 = inlined_call_operand.vmem [shape: f32[2,1,32], index: 8, kind: input, shape index: {}]
  %s9 = inlined_call_operand.vmem [shape: f32[2,1,32], index: 9, kind: input, shape index: {}]
  %s10 = inlined_call_operand.hbm [shape: f32[2,32,128], index: 10, kind: input, shape index: {}]
  %s11 = inlined_call_operand.vmem [shape: f32[2,1,128], index: 11, kind: input, shape index: {}]
  %s12 = inlined_call_operand.vmem [shape: f32[2,128,32], index: 12, kind: input, shape index: {}]
  %s13 = inlined_call_operand.vmem [shape: f32[2,1,32], index: 13, kind: input, shape index: {}]
  %s14 = inlined_call_operand.vmem [shape: f32[2,1,32], index: 14, kind: input, shape index: {}]
  %s15 = inlined_call_operand.vmem [shape: f32[2,1,32], index: 15, kind: input, shape index: {}]
  %s16 = inlined_call_operand.vmem [shape: f32[32,2], index: 16, kind: input, shape index: {}]
  %s17 = inlined_call_operand.vmem [shape: f32[1,2], index: 17, kind: input, shape index: {}]
  %s18 = inlined_call_operand.hbm [shape: f32[2,1,2], index: 18, kind: output, shape index: {}]
  %s19 = sld [smem:[#allocation0]]
  $region117: #{tpu_custom_call.1} parent=0
    _
  %s21 = ssub.s32 1, %s19
  %s22 = scalar_select 0, %s21, %s19
  $region1: #{tpu_custom_call.1} parent=0
    #allocation3 [shape = 'u8[32768]{0}', space=vmem, size = 0x8000, scoped, tag = 'input window, operand 10, single buffered']
    #allocation4 [shape = 's32[2]{0}', space=sflag, size = 0x8, scoped, tag = 'scoped memory for tpu_custom_call.1']
    #allocation5 [shape = 's32[2]{0}', space=sflag, size = 0x8, scoped, tag = 'scoped memory for tpu_custom_call.1']
    #allocation6 [shape = 'u8[1024]{0}', space=vmem, size = 0x400, scoped, tag = 'output window, operand 0']
    %23 = vsyncpa [#allocation4], 0
    %24 = vsyncpa [#allocation5], 0
    %s25 = scalar_lea.sflag [#allocation5], 1
    %26 = vsyncpa %s25, 0
    loop: start=0, step=1, limit=6
    $region2: #{tpu_custom_call.1} parent=1 // loop_pre_header
      _
    $region3: #{tpu_custom_call.1} parent=1 // loop_header
      %s28 = sphi 0, %s32
      %p29 = scmp.ge.s32.totalorder %s28, 6
      %s35 = sphi 0, %s47
      %s36 = sphi 0, %s43
      %s37 = sphi 0, %s35
      %s38 = sphi 0, %s36
      %s39 = sphi 0, %s37
      %s40 = sphi 0, %s38
      %s50 = sphi 0, %s52
      %s53 = sphi 0, %s50
      %s54 = sphi 0, %s53
      %s70 = sphi 0, %s54
      %s74 = sphi 0, %s74
      %s76 = sphi 0, %s74
      %s77 = sphi 0, %s76
      %s91 = sphi 0, %s77
      %s95 = sphi 0, %s95
      %s97 = sphi 0, %s95
      %s98 = sphi 0, %s97
      %s112 = sphi 0, %s98
      %s118 = sphi 0, %s120
      %s121 = sphi 0, %s118
      %s122 = sphi 0, %s121
      %s138 = sphi 0, %s122
      %s142 = sphi 0, %s142
      %s144 = sphi 0, %s142
      %s145 = sphi 0, %s144
      %s159 = sphi 0, %s145
      %s163 = sphi 0, %s163
      %s165 = sphi 0, %s163
      %s166 = sphi 0, %s165
      %s180 = sphi 0, %s166
      %s184 = sphi 0, %s184
      %s186 = sphi 0, %s184
      %s187 = sphi 0, %s186
      %s201 = sphi 0, %s187
      %s205 = sphi 0, %s205
      %s207 = sphi 0, %s205
      %s208 = sphi 0, %s207
      %s222 = sphi 0, %s208
      %s226 = sphi 0, %s226
      %s228 = sphi 0, %s226
      %s229 = sphi 0, %s228
      %s243 = sphi 0, %s229
      %s247 = sphi 0, %s247
      %s249 = sphi 0, %s247
      %s250 = sphi 0, %s249
      %s264 = sphi 0, %s250
      %s268 = sphi 0, %s268
      %s270 = sphi 0, %s268
      %s271 = sphi 0, %s270
      %s285 = sphi 0, %s271
      %s289 = sphi 0, %s289
      %s291 = sphi 0, %s289
      %s292 = sphi 0, %s291
      %s306 = sphi 0, %s292
      %s310 = sphi 0, %s310
      %s312 = sphi 0, %s310
      %s313 = sphi 0, %s312
      %s327 = sphi 0, %s313
      %s331 = sphi 0, %s331
      %s333 = sphi 0, %s331
      %s334 = sphi 0, %s333
      %s348 = sphi 0, %s334
      %s352 = sphi 0, %s352
      %s354 = sphi 0, %s352
      %s355 = sphi 0, %s354
      %s369 = sphi 0, %s355
      %s373 = sphi 0, %s373
      %s375 = sphi 0, %s373
      %s376 = sphi 0, %s375
      %s390 = sphi 0, %s376
      %s394 = sphi 0, %s394
      %s396 = sphi 0, %s394
      %s397 = sphi 0, %s396
      %s411 = sphi 0, %s397
      %s415 = sphi 0, %s415
      %s417 = sphi 0, %s415
      %s418 = sphi 0, %s417
      %s432 = sphi 0, %s418
      %s438 = sphi 0, %s440
      %s441 = sphi 0, %s438
      %s442 = sphi 0, %s441
      %s458 = sphi 0, %s442
    $region4: #{tpu_custom_call.1} parent=1 // loop_header_branch
      %31 = sbr.rel (%p29) target = $region8
    $region5: #{tpu_custom_call.1} parent=1 // loop_body
      %s33 = ssub.s32 %s28, 1
      %s34 = ssub.s32 %s28, 2
      %s41 = sadd.s32 1, %s36
      %p42 = scmp.ge.s32.totalorder %s41, 2
      %s43 = scalar_select %p42, 0, %s41
      %s44 = sadd.s32 1, %s35
      %s45 = scalar_select %p42, %s44, %s35
      %p46 = scmp.ge.s32.totalorder %s45, 2
      %s47 = scalar_select %p46, 0, %s45
      %s48 = ssub.s32 %s35, %s47
      %p49 = scmp.eq.s32.totalorder %s48, 0
      %s51 = sadd.s32 %s50, 1
      %s52 = scalar_select %p49, %s50, %s51
      %p55 = pneg %p49
      %p56 = scmp.eq.s32.totalorder %s28, 3
      %p57 = por %p55, %p56
      %p58 = scmp.ne.s32.totalorder %s50, %s53
      %p59 = scmp.eq.s32.totalorder %s28, 0
      %p60 = por %p58, %p59
      %p61 = scmp.ne.s32.totalorder %s50, %s53
      %p62 = scmp.eq.s32.totalorder %s33, 3
      %p63 = por %p61, %p62
      %p64 = scmp.ne.s32.totalorder %s53, %s54
      %p65 = scmp.eq.s32.totalorder %s33, 0
      %p66 = por %p64, %p65
      %p67 = scmp.ne.s32.totalorder %s53, %s54
      %p68 = scmp.eq.s32.totalorder %s34, 3
      %p69 = por %p67, %p68
      %p71 = scmp.ne.s32.totalorder %s54, %s70
      %p72 = scmp.eq.s32.totalorder %s34, 0
      %p73 = por %p71, %p72
      %s75 = sadd.s32 %s74, 1
      %p78 = scmp.eq.s32.totalorder %s28, 3
      %p79 = scmp.ne.s32.totalorder %s74, %s76
      %p80 = scmp.eq.s32.totalorder %s28, 0
      %p81 = por %p79, %p80
      %p82 = scmp.ne.s32.totalorder %s74, %s76
      %p83 = scmp.eq.s32.totalorder %s33, 3
      %p84 = por %p82, %p83
      %p85 = scmp.ne.s32.totalorder %s76, %s77
      %p86 = scmp.eq.s32.totalorder %s33, 0
      %p87 = por %p85, %p86
      %p88 = scmp.ne.s32.totalorder %s76, %s77
      %p89 = scmp.eq.s32.totalorder %s34, 3
      %p90 = por %p88, %p89
      %p92 = scmp.ne.s32.totalorder %s77, %s91
      %p93 = scmp.eq.s32.totalorder %s34, 0
      %p94 = por %p92, %p93
      %s96 = sadd.s32 %s95, 1
      %p99 = scmp.eq.s32.totalorder %s28, 3
      %p100 = scmp.ne.s32.totalorder %s95, %s97
      %p101 = scmp.eq.s32.totalorder %s28, 0
      %p102 = por %p100, %p101
      %p103 = scmp.ne.s32.totalorder %s95, %s97
      %p104 = scmp.eq.s32.totalorder %s33, 3
      %p105 = por %p103, %p104
      %p106 = scmp.ne.s32.totalorder %s97, %s98
      %p107 = scmp.eq.s32.totalorder %s33, 0
      %p108 = por %p106, %p107
      %p109 = scmp.ne.s32.totalorder %s97, %s98
      %p110 = scmp.eq.s32.totalorder %s34, 3
      %p111 = por %p109, %p110
      %p113 = scmp.ne.s32.totalorder %s98, %s112
      %p114 = scmp.eq.s32.totalorder %s34, 0
      %p115 = por %p113, %p114
      %s116 = ssub.s32 %s35, %s47
      %p117 = scmp.eq.s32.totalorder %s116, 0
      %s119 = sadd.s32 %s118, 1
      %s120 = scalar_select %p117, %s118, %s119
      %p123 = pneg %p117
      %p124 = scmp.eq.s32.totalorder %s28, 3
      %p125 = por %p123, %p124
      %p126 = scmp.ne.s32.totalorder %s118, %s121
      %p127 = scmp.eq.s32.totalorder %s28, 0
      %p128 = por %p126, %p127
      %p129 = scmp.ne.s32.totalorder %s118, %s121
      %p130 = scmp.eq.s32.totalorder %s33, 3
      %p131 = por %p129, %p130
      %p132 = scmp.ne.s32.totalorder %s121, %s122
      %p133 = scmp.eq.s32.totalorder %s33, 0
      %p134 = por %p132, %p133
      %p135 = scmp.ne.s32.totalorder %s121, %s122
      %p136 = scmp.eq.s32.totalorder %s34, 3
      %p137 = por %p135, %p136
      %p139 = scmp.ne.s32.totalorder %s122, %s138
      %p140 = scmp.eq.s32.totalorder %s34, 0
      %p141 = por %p139, %p140
      %s143 = sadd.s32 %s142, 1
      %p146 = scmp.eq.s32.totalorder %s28, 3
      %p147 = scmp.ne.s32.totalorder %s142, %s144
      %p148 = scmp.eq.s32.totalorder %s28, 0
      %p149 = por %p147, %p148
      %p150 = scmp.ne.s32.totalorder %s142, %s144
      %p151 = scmp.eq.s32.totalorder %s33, 3
      %p152 = por %p150, %p151
      %p153 = scmp.ne.s32.totalorder %s144, %s145
      %p154 = scmp.eq.s32.totalorder %s33, 0
      %p155 = por %p153, %p154
      %p156 = scmp.ne.s32.totalorder %s144, %s145
      %p157 = scmp.eq.s32.totalorder %s34, 3
      %p158 = por %p156, %p157
      %p160 = scmp.ne.s32.totalorder %s145, %s159
      %p161 = scmp.eq.s32.totalorder %s34, 0
      %p162 = por %p160, %p161
      %s164 = sadd.s32 %s163, 1
      %p167 = scmp.eq.s32.totalorder %s28, 3
      %p168 = scmp.ne.s32.totalorder %s163, %s165
      %p169 = scmp.eq.s32.totalorder %s28, 0
      %p170 = por %p168, %p169
      %p171 = scmp.ne.s32.totalorder %s163, %s165
      %p172 = scmp.eq.s32.totalorder %s33, 3
      %p173 = por %p171, %p172
      %p174 = scmp.ne.s32.totalorder %s165, %s166
      %p175 = scmp.eq.s32.totalorder %s33, 0
      %p176 = por %p174, %p175
      %p177 = scmp.ne.s32.totalorder %s165, %s166
      %p178 = scmp.eq.s32.totalorder %s34, 3
      %p179 = por %p177, %p178
      %p181 = scmp.ne.s32.totalorder %s166, %s180
      %p182 = scmp.eq.s32.totalorder %s34, 0
      %p183 = por %p181, %p182
      %s185 = sadd.s32 %s184, 1
      %p188 = scmp.eq.s32.totalorder %s28, 3
      %p189 = scmp.ne.s32.totalorder %s184, %s186
      %p190 = scmp.eq.s32.totalorder %s28, 0
      %p191 = por %p189, %p190
      %p192 = scmp.ne.s32.totalorder %s184, %s186
      %p193 = scmp.eq.s32.totalorder %s33, 3
      %p194 = por %p192, %p193
      %p195 = scmp.ne.s32.totalorder %s186, %s187
      %p196 = scmp.eq.s32.totalorder %s33, 0
      %p197 = por %p195, %p196
      %p198 = scmp.ne.s32.totalorder %s186, %s187
      %p199 = scmp.eq.s32.totalorder %s34, 3
      %p200 = por %p198, %p199
      %p202 = scmp.ne.s32.totalorder %s187, %s201
      %p203 = scmp.eq.s32.totalorder %s34, 0
      %p204 = por %p202, %p203
      %s206 = sadd.s32 %s205, 1
      %p209 = scmp.eq.s32.totalorder %s28, 3
      %p210 = scmp.ne.s32.totalorder %s205, %s207
      %p211 = scmp.eq.s32.totalorder %s28, 0
      %p212 = por %p210, %p211
      %p213 = scmp.ne.s32.totalorder %s205, %s207
      %p214 = scmp.eq.s32.totalorder %s33, 3
      %p215 = por %p213, %p214
      %p216 = scmp.ne.s32.totalorder %s207, %s208
      %p217 = scmp.eq.s32.totalorder %s33, 0
      %p218 = por %p216, %p217
      %p219 = scmp.ne.s32.totalorder %s207, %s208
      %p220 = scmp.eq.s32.totalorder %s34, 3
      %p221 = por %p219, %p220
      %p223 = scmp.ne.s32.totalorder %s208, %s222
      %p224 = scmp.eq.s32.totalorder %s34, 0
      %p225 = por %p223, %p224
      %s227 = sadd.s32 %s226, 1
      %p230 = scmp.eq.s32.totalorder %s28, 3
      %p231 = scmp.ne.s32.totalorder %s226, %s228
      %p232 = scmp.eq.s32.totalorder %s28, 0
      %p233 = por %p231, %p232
      %p234 = scmp.ne.s32.totalorder %s226, %s228
      %p235 = scmp.eq.s32.totalorder %s33, 3
      %p236 = por %p234, %p235
      %p237 = scmp.ne.s32.totalorder %s228, %s229
      %p238 = scmp.eq.s32.totalorder %s33, 0
      %p239 = por %p237, %p238
      %p240 = scmp.ne.s32.totalorder %s228, %s229
      %p241 = scmp.eq.s32.totalorder %s34, 3
      %p242 = por %p240, %p241
      %p244 = scmp.ne.s32.totalorder %s229, %s243
      %p245 = scmp.eq.s32.totalorder %s34, 0
      %p246 = por %p244, %p245
      %s248 = sadd.s32 %s247, 1
      %p251 = scmp.eq.s32.totalorder %s28, 3
      %p252 = scmp.ne.s32.totalorder %s247, %s249
      %p253 = scmp.eq.s32.totalorder %s28, 0
      %p254 = por %p252, %p253
      %p255 = scmp.ne.s32.totalorder %s247, %s249
      %p256 = scmp.eq.s32.totalorder %s33, 3
      %p257 = por %p255, %p256
      %p258 = scmp.ne.s32.totalorder %s249, %s250
      %p259 = scmp.eq.s32.totalorder %s33, 0
      %p260 = por %p258, %p259
      %p261 = scmp.ne.s32.totalorder %s249, %s250
      %p262 = scmp.eq.s32.totalorder %s34, 3
      %p263 = por %p261, %p262
      %p265 = scmp.ne.s32.totalorder %s250, %s264
      %p266 = scmp.eq.s32.totalorder %s34, 0
      %p267 = por %p265, %p266
      %s269 = sadd.s32 %s268, 1
      %p272 = scmp.eq.s32.totalorder %s28, 3
      %p273 = scmp.ne.s32.totalorder %s268, %s270
      %p274 = scmp.eq.s32.totalorder %s28, 0
      %p275 = por %p273, %p274
      %p276 = scmp.ne.s32.totalorder %s268, %s270
      %p277 = scmp.eq.s32.totalorder %s33, 3
      %p278 = por %p276, %p277
      %p279 = scmp.ne.s32.totalorder %s270, %s271
      %p280 = scmp.eq.s32.totalorder %s33, 0
      %p281 = por %p279, %p280
      %p282 = scmp.ne.s32.totalorder %s270, %s271
      %p283 = scmp.eq.s32.totalorder %s34, 3
      %p284 = por %p282, %p283
      %p286 = scmp.ne.s32.totalorder %s271, %s285
      %p287 = scmp.eq.s32.totalorder %s34, 0
      %p288 = por %p286, %p287
      %s290 = sadd.s32 %s289, 1
      %p293 = scmp.eq.s32.totalorder %s28, 3
      %p294 = scmp.ne.s32.totalorder %s289, %s291
      %p295 = scmp.eq.s32.totalorder %s28, 0
      %p296 = por %p294, %p295
      %p297 = scmp.ne.s32.totalorder %s289, %s291
      %p298 = scmp.eq.s32.totalorder %s33, 3
      %p299 = por %p297, %p298
      %p300 = scmp.ne.s32.totalorder %s291, %s292
      %p301 = scmp.eq.s32.totalorder %s33, 0
      %p302 = por %p300, %p301
      %p303 = scmp.ne.s32.totalorder %s291, %s292
      %p304 = scmp.eq.s32.totalorder %s34, 3
      %p305 = por %p303, %p304
      %p307 = scmp.ne.s32.totalorder %s292, %s306
      %p308 = scmp.eq.s32.totalorder %s34, 0
      %p309 = por %p307, %p308
      %s311 = sadd.s32 %s310, 1
      %p314 = scmp.eq.s32.totalorder %s28, 3
      %p315 = scmp.ne.s32.totalorder %s310, %s312
      %p316 = scmp.eq.s32.totalorder %s28, 0
      %p317 = por %p315, %p316
      %p318 = scmp.ne.s32.totalorder %s310, %s312
      %p319 = scmp.eq.s32.totalorder %s33, 3
      %p320 = por %p318, %p319
      %p321 = scmp.ne.s32.totalorder %s312, %s313
      %p322 = scmp.eq.s32.totalorder %s33, 0
      %p323 = por %p321, %p322
      %p324 = scmp.ne.s32.totalorder %s312, %s313
      %p325 = scmp.eq.s32.totalorder %s34, 3
      %p326 = por %p324, %p325
      %p328 = scmp.ne.s32.totalorder %s313, %s327
      %p329 = scmp.eq.s32.totalorder %s34, 0
      %p330 = por %p328, %p329
      %s332 = sadd.s32 %s331, 1
      %p335 = scmp.eq.s32.totalorder %s28, 3
      %p336 = scmp.ne.s32.totalorder %s331, %s333
      %p337 = scmp.eq.s32.totalorder %s28, 0
      %p338 = por %p336, %p337
      %p339 = scmp.ne.s32.totalorder %s331, %s333
      %p340 = scmp.eq.s32.totalorder %s33, 3
      %p341 = por %p339, %p340
      %p342 = scmp.ne.s32.totalorder %s333, %s334
      %p343 = scmp.eq.s32.totalorder %s33, 0
      %p344 = por %p342, %p343
      %p345 = scmp.ne.s32.totalorder %s333, %s334
      %p346 = scmp.eq.s32.totalorder %s34, 3
      %p347 = por %p345, %p346
      %p349 = scmp.ne.s32.totalorder %s334, %s348
      %p350 = scmp.eq.s32.totalorder %s34, 0
      %p351 = por %p349, %p350
      %s353 = sadd.s32 %s352, 1
      %p356 = scmp.eq.s32.totalorder %s28, 3
      %p357 = scmp.ne.s32.totalorder %s352, %s354
      %p358 = scmp.eq.s32.totalorder %s28, 0
      %p359 = por %p357, %p358
      %p360 = scmp.ne.s32.totalorder %s352, %s354
      %p361 = scmp.eq.s32.totalorder %s33, 3
      %p362 = por %p360, %p361
      %p363 = scmp.ne.s32.totalorder %s354, %s355
      %p364 = scmp.eq.s32.totalorder %s33, 0
      %p365 = por %p363, %p364
      %p366 = scmp.ne.s32.totalorder %s354, %s355
      %p367 = scmp.eq.s32.totalorder %s34, 3
      %p368 = por %p366, %p367
      %p370 = scmp.ne.s32.totalorder %s355, %s369
      %p371 = scmp.eq.s32.totalorder %s34, 0
      %p372 = por %p370, %p371
      %s374 = sadd.s32 %s373, 1
      %p377 = scmp.eq.s32.totalorder %s28, 3
      %p378 = scmp.ne.s32.totalorder %s373, %s375
      %p379 = scmp.eq.s32.totalorder %s28, 0
      %p380 = por %p378, %p379
      %p381 = scmp.ne.s32.totalorder %s373, %s375
      %p382 = scmp.eq.s32.totalorder %s33, 3
      %p383 = por %p381, %p382
      %p384 = scmp.ne.s32.totalorder %s375, %s376
      %p385 = scmp.eq.s32.totalorder %s33, 0
      %p386 = por %p384, %p385
      %p387 = scmp.ne.s32.totalorder %s375, %s376
      %p388 = scmp.eq.s32.totalorder %s34, 3
      %p389 = por %p387, %p388
      %p391 = scmp.ne.s32.totalorder %s376, %s390
      %p392 = scmp.eq.s32.totalorder %s34, 0
      %p393 = por %p391, %p392
      %s395 = sadd.s32 %s394, 1
      %p398 = scmp.eq.s32.totalorder %s28, 3
      %p399 = scmp.ne.s32.totalorder %s394, %s396
      %p400 = scmp.eq.s32.totalorder %s28, 0
      %p401 = por %p399, %p400
      %p402 = scmp.ne.s32.totalorder %s394, %s396
      %p403 = scmp.eq.s32.totalorder %s33, 3
      %p404 = por %p402, %p403
      %p405 = scmp.ne.s32.totalorder %s396, %s397
      %p406 = scmp.eq.s32.totalorder %s33, 0
      %p407 = por %p405, %p406
      %p408 = scmp.ne.s32.totalorder %s396, %s397
      %p409 = scmp.eq.s32.totalorder %s34, 3
      %p410 = por %p408, %p409
      %p412 = scmp.ne.s32.totalorder %s397, %s411
      %p413 = scmp.eq.s32.totalorder %s34, 0
      %p414 = por %p412, %p413
      %s416 = sadd.s32 %s415, 1
      %p419 = scmp.eq.s32.totalorder %s28, 3
      %p420 = scmp.ne.s32.totalorder %s415, %s417
      %p421 = scmp.eq.s32.totalorder %s28, 0
      %p422 = por %p420, %p421
      %p423 = scmp.ne.s32.totalorder %s415, %s417
      %p424 = scmp.eq.s32.totalorder %s33, 3
      %p425 = por %p423, %p424
      %p426 = scmp.ne.s32.totalorder %s417, %s418
      %p427 = scmp.eq.s32.totalorder %s33, 0
      %p428 = por %p426, %p427
      %p429 = scmp.ne.s32.totalorder %s417, %s418
      %p430 = scmp.eq.s32.totalorder %s34, 3
      %p431 = por %p429, %p430
      %p433 = scmp.ne.s32.totalorder %s418, %s432
      %p434 = scmp.eq.s32.totalorder %s34, 0
      %p435 = por %p433, %p434
      %s436 = ssub.s32 %s35, %s47
      %p437 = scmp.eq.s32.totalorder %s436, 0
      %s439 = sadd.s32 %s438, 1
      %s440 = scalar_select %p437, %s438, %s439
      %p443 = pneg %p437
      %p444 = scmp.eq.s32.totalorder %s28, 3
      %p445 = por %p443, %p444
      %p446 = scmp.ne.s32.totalorder %s438, %s441
      %p447 = scmp.eq.s32.totalorder %s28, 0
      %p448 = por %p446, %p447
      %p449 = scmp.ne.s32.totalorder %s438, %s441
      %p450 = scmp.eq.s32.totalorder %s33, 3
      %p451 = por %p449, %p450
      %p452 = scmp.ne.s32.totalorder %s441, %s442
      %p453 = scmp.eq.s32.totalorder %s33, 0
      %p454 = por %p452, %p453
      %p455 = scmp.ne.s32.totalorder %s441, %s442
      %p456 = scmp.eq.s32.totalorder %s34, 3
      %p457 = por %p455, %p456
      %p459 = scmp.ne.s32.totalorder %s442, %s458
      %p460 = scmp.eq.s32.totalorder %s34, 0
      %p461 = por %p459, %p460
      %p462 = scmp.le.s32.totalorder 1, %s28
      %p463 = scmp.lt.s32.totalorder %s28, 5
      %p464 = pnand %p462, %p463
      %p465 = pneg %p464
      // Predicated region
      $region9: #{tpu_custom_call.1} parent=5 // pred_check
        _
      $region10: #{tpu_custom_call.1} parent=5 // pred_check_branch
        %467 = sbr.rel (%p464) target = $region12
      $region11: #{tpu_custom_call.1} parent=5 // pred_region
        %s468 = ssub.s32 %s28, 1
        // Predicated region
        $region13: #{tpu_custom_call.1} parent=11 // pred_check
          %p469 = pneg %p87
        $region14: #{tpu_custom_call.1} parent=11 // pred_check_branch
          %471 = sbr.rel (%p469) target = $region16
        $region15: #{tpu_custom_call.1} parent=11 // pred_region
          _
        $region16: #{tpu_custom_call.1} parent=11 // pred_fallthru
          _
        // Predicated region
        $region17: #{tpu_custom_call.1} parent=11 // pred_check
          %p472 = pneg %p108
        $region18: #{tpu_custom_call.1} parent=11 // pred_check_branch
          %474 = sbr.rel (%p472) target = $region20
        $region19: #{tpu_custom_call.1} parent=11 // pred_region
          _
        $region20: #{tpu_custom_call.1} parent=11 // pred_fallthru
          _
        // Predicated region
        $region21: #{tpu_custom_call.1} parent=11 // pred_check
          %p475 = pneg %p155
        $region22: #{tpu_custom_call.1} parent=11 // pred_check_branch
          %477 = sbr.rel (%p475) target = $region24
        $region23: #{tpu_custom_call.1} parent=11 // pred_region
          _
        $region24: #{tpu_custom_call.1} parent=11 // pred_fallthru
          _
        // Predicated region
        $region25: #{tpu_custom_call.1} parent=11 // pred_check
          %p478 = pneg %p176
        $region26: #{tpu_custom_call.1} parent=11 // pred_check_branch
          %480 = sbr.rel (%p478) target = $region28
        $region27: #{tpu_custom_call.1} parent=11 // pred_region
          _
        $region28: #{tpu_custom_call.1} parent=11 // pred_fallthru
          _
        // Predicated region
        $region29: #{tpu_custom_call.1} parent=11 // pred_check
          %p481 = pneg %p197
        $region30: #{tpu_custom_call.1} parent=11 // pred_check_branch
          %483 = sbr.rel (%p481) target = $region32
        $region31: #{tpu_custom_call.1} parent=11 // pred_region
          _
        $region32: #{tpu_custom_call.1} parent=11 // pred_fallthru
          _
        // Predicated region
        $region33: #{tpu_custom_call.1} parent=11 // pred_check
          %p484 = pneg %p218
        $region34: #{tpu_custom_call.1} parent=11 // pred_check_branch
          %486 = sbr.rel (%p484) target = $region36
        $region35: #{tpu_custom_call.1} parent=11 // pred_region
          _
        $region36: #{tpu_custom_call.1} parent=11 // pred_fallthru
          _
        // Predicated region
        $region37: #{tpu_custom_call.1} parent=11 // pred_check
          %p487 = pneg %p239
        $region38: #{tpu_custom_call.1} parent=11 // pred_check_branch
          %489 = sbr.rel (%p487) target = $region40
        $region39: #{tpu_custom_call.1} parent=11 // pred_region
          _
        $region40: #{tpu_custom_call.1} parent=11 // pred_fallthru
          _
        // Predicated region
        $region41: #{tpu_custom_call.1} parent=11 // pred_check
          %p490 = pneg %p260
        $region42: #{tpu_custom_call.1} parent=11 // pred_check_branch
          %492 = sbr.rel (%p490) target = $region44
        $region43: #{tpu_custom_call.1} parent=11 // pred_region
          _
        $region44: #{tpu_custom_call.1} parent=11 // pred_fallthru
          _
        // Predicated region
        $region45: #{tpu_custom_call.1} parent=11 // pred_check
          %p493 = pneg %p281
        $region46: #{tpu_custom_call.1} parent=11 // pred_check_branch
          %495 = sbr.rel (%p493) target = $region48
        $region47: #{tpu_custom_call.1} parent=11 // pred_region
          %497 = vsyncadd [#allocation4], 0
          %s498 = sshll.u32 %s10, 4
          %s499 = int_to_ptr.hbm [resolvable:$true] %s498
          %s500 = sshll.u32 [#allocation3], 4
          %s501 = int_to_ptr.vmem [resolvable:$true] %s500
          %506 = dma.hbm_to_vmem [thread:$0]  %s499, 1024, %s501, [#allocation4], 128, 128, 8
        $region48: #{tpu_custom_call.1} parent=11 // pred_fallthru
          _
        // Predicated region
        $region49: #{tpu_custom_call.1} parent=11 // pred_check
          %p507 = pneg %p302
        $region50: #{tpu_custom_call.1} parent=11 // pred_check_branch
          %509 = sbr.rel (%p507) target = $region52
        $region51: #{tpu_custom_call.1} parent=11 // pred_region
          _
        $region52: #{tpu_custom_call.1} parent=11 // pred_fallthru
          _
        // Predicated region
        $region53: #{tpu_custom_call.1} parent=11 // pred_check
          %p510 = pneg %p323
        $region54: #{tpu_custom_call.1} parent=11 // pred_check_branch
          %512 = sbr.rel (%p510) target = $region56
        $region55: #{tpu_custom_call.1} parent=11 // pred_region
          _
        $region56: #{tpu_custom_call.1} parent=11 // pred_fallthru
          _
        // Predicated region
        $region57: #{tpu_custom_call.1} parent=11 // pred_check
          %p513 = pneg %p344
        $region58: #{tpu_custom_call.1} parent=11 // pred_check_branch
          %515 = sbr.rel (%p513) target = $region60
        $region59: #{tpu_custom_call.1} parent=11 // pred_region
          _
        $region60: #{tpu_custom_call.1} parent=11 // pred_fallthru
          _
        // Predicated region
        $region61: #{tpu_custom_call.1} parent=11 // pred_check
          %p516 = pneg %p365
        $region62: #{tpu_custom_call.1} parent=11 // pred_check_branch
          %518 = sbr.rel (%p516) target = $region64
        $region63: #{tpu_custom_call.1} parent=11 // pred_region
          _
        $region64: #{tpu_custom_call.1} parent=11 // pred_fallthru
          _
        // Predicated region
        $region65: #{tpu_custom_call.1} parent=11 // pred_check
          %p519 = pneg %p386
        $region66: #{tpu_custom_call.1} parent=11 // pred_check_branch
          %521 = sbr.rel (%p519) target = $region68
        $region67: #{tpu_custom_call.1} parent=11 // pred_region
          _
        $region68: #{tpu_custom_call.1} parent=11 // pred_fallthru
          _
        // Predicated region
        $region69: #{tpu_custom_call.1} parent=11 // pred_check
          %p522 = pneg %p407
        $region70: #{tpu_custom_call.1} parent=11 // pred_check_branch
          %524 = sbr.rel (%p522) target = $region72
        $region71: #{tpu_custom_call.1} parent=11 // pred_region
          _
        $region72: #{tpu_custom_call.1} parent=11 // pred_fallthru
          _
        // Predicated region
        $region73: #{tpu_custom_call.1} parent=11 // pred_check
          %p525 = pneg %p428
        $region74: #{tpu_custom_call.1} parent=11 // pred_check_branch
          %527 = sbr.rel (%p525) target = $region76
        $region75: #{tpu_custom_call.1} parent=11 // pred_region
          _
        $region76: #{tpu_custom_call.1} parent=11 // pred_fallthru
          _
      $region12: #{tpu_custom_call.1} parent=5 // pred_fallthru
        _
      %p528 = scmp.lt.s32.totalorder %s28, 4
      // Predicated region
      $region77: #{tpu_custom_call.1} parent=5 // pred_check
        %p529 = pneg %p528
      $region78: #{tpu_custom_call.1} parent=5 // pred_check_branch
        %531 = sbr.rel (%p529) target = $region80
      $region79: #{tpu_custom_call.1} parent=5 // pred_region
        // Predicated region
        $region81: #{tpu_custom_call.1} parent=79 // pred_check
          %p532 = pneg %p60
        $region82: #{tpu_custom_call.1} parent=79 // pred_check_branch
          %534 = sbr.rel (%p532) target = $region84
        $region83: #{tpu_custom_call.1} parent=79 // pred_region
          %p535 = scmp.lt.s32.totalorder %s35, 1
          %s536 = scalar_select %p535, %s35, 1
          %s537 = smul.addr %s536, 8
          %s538 = scalar_lea.vmem %s0, %s537
        $region84: #{tpu_custom_call.1} parent=79 // pred_fallthru
          _
        // Predicated region
        $region85: #{tpu_custom_call.1} parent=79 // pred_check
          %p539 = pneg %p128
        $region86: #{tpu_custom_call.1} parent=79 // pred_check_branch
          %541 = sbr.rel (%p539) target = $region88
        $region87: #{tpu_custom_call.1} parent=79 // pred_region
          %p542 = scmp.lt.s32.totalorder %s35, 1
          %s543 = scalar_select %p542, %s35, 1
          %s544 = smul.addr %s543, 4
          %s545 = smul.addr %s544, 8
          %s546 = scalar_lea.vmem %s3, %s545
        $region88: #{tpu_custom_call.1} parent=79 // pred_fallthru
          _
      $region80: #{tpu_custom_call.1} parent=5 // pred_fallthru
        _
      %p547 = scmp.le.s32.totalorder 1, %s28
      %p548 = scmp.lt.s32.totalorder %s28, 5
      %p549 = pnand %p547, %p548
      %p550 = pneg %p549
      // Predicated region
      $region89: #{tpu_custom_call.1} parent=5 // pred_check
        _
      $region90: #{tpu_custom_call.1} parent=5 // pred_check_branch
        %552 = sbr.rel (%p549) target = $region92
      $region91: #{tpu_custom_call.1} parent=5 // pred_region
        %s553 = ssub.s32 %s28, 1
        // Predicated region
        $region93: #{tpu_custom_call.1} parent=91 // pred_check
          %p554 = pneg %p281
        $region94: #{tpu_custom_call.1} parent=91 // pred_check_branch
          %556 = sbr.rel (%p554) target = $region96
        $region95: #{tpu_custom_call.1} parent=91 // pred_region
          %558 = dma.done [#allocation4], 1024
        $region96: #{tpu_custom_call.1} parent=91 // pred_fallthru
          _
        %p559 = scmp.lt.s32.totalorder %s37, 1
        %s560 = scalar_select %p559, %s37, 1
        %s561 = smul.addr %s560, 8
        %s562 = scalar_lea.vmem %s0, %s561
        %p563 = pneg %p66
        %p564 = pneg %p63
        %p565 = pneg %p87
        %p566 = pneg %p84
        %p567 = pneg %p108
        %p568 = pneg %p105
        %p569 = scmp.lt.s32.totalorder %s37, 1
        %s570 = scalar_select %p569, %s37, 1
        %s571 = smul.addr %s570, 4
        %s572 = smul.addr %s571, 8
        %s573 = scalar_lea.vmem %s3, %s572
        %p574 = pneg %p134
        %p575 = pneg %p131
        %p576 = pneg %p155
        %p577 = pneg %p152
        %p578 = pneg %p176
        %p579 = pneg %p173
        %p580 = pneg %p197
        %p581 = pneg %p194
        %p582 = pneg %p218
        %p583 = pneg %p215
        %p584 = pneg %p239
        %p585 = pneg %p236
        %p586 = pneg %p260
        %p587 = pneg %p257
        %p588 = pneg %p281
        %p589 = pneg %p278
        %p590 = pneg %p302
        %p591 = pneg %p299
        %p592 = pneg %p323
        %p593 = pneg %p320
        %p594 = pneg %p344
        %p595 = pneg %p341
        %p596 = pneg %p365
        %p597 = pneg %p362
        %p598 = pneg %p386
        %p599 = pneg %p383
        %p600 = pneg %p407
        %p601 = pneg %p404
        %p602 = pneg %p428
        %p603 = pneg %p425
        %p604 = pneg %p454
        %p605 = pneg %p451
        %s606 = sand.u32 %s441, 1
        %s607 = scalar_lea.sflag [#allocation5], %s606
        %s608 = sand.u32 %s441, 1
        %s609 = scalar_lea.vmem [#allocation6], %s608
        %p610 = scmp.lt.s32.totalorder %s37, 1
        %s611 = scalar_select %p610, %s37, 1
        %s612 = smul.addr %s611, 8
        %s613 = scalar_lea.vmem %s0, %s612
        %p614 = scmp.lt.s32.totalorder %s37, 1
        %s615 = scalar_select %p614, %s37, 1
        %s616 = smul.addr %s615, 4
        %s617 = smul.addr %s616, 8
        %s618 = scalar_lea.vmem %s3, %s617
        %p619 = scmp.eq.s32.totalorder %s38, 0
        // Predicated region
        $region97: #{tpu_custom_call.1} parent=91 // pred_check
          %p620 = pneg %p619
        $region98: #{tpu_custom_call.1} parent=91 // pred_check_branch
          %622 = sbr.rel (%p620) target = $region100
        $region99: #{tpu_custom_call.1} parent=91 // pred_region
          %v623 = vld [vmem:[%s613] sm:$0xff]
          %v624 = vlaneseq
          %v625 = vand.u32 %v624, 127
          %626 = vset.pattern.permute.xlu0 0
          %627 = vperm.xlu0 %626, %v623
          %v628 = vpop.permute.xlu0 %627
          %vm629 = vcmp.eq.s32.totalorder %v628, %v625
          %v630 = vsel %vm629, 1, 0
          %v631 = vcvt.s32.f32 %v630
          %v632 = vld [vmem:[%s1] sm:$0xff]
          %v633 = vld [vmem:[%s1 + $0x8] sm:$0xff]
          %v634 = vld [vmem:[%s1 + $0x10] sm:$0xff]
          %v635 = vld [vmem:[%s1 + $0x18] sm:$0xff]
          %v636 = vld [vmem:[%s1 + $0x20] sm:$0xff]
          %v637 = vld [vmem:[%s1 + $0x28] sm:$0xff]
          %v638 = vld [vmem:[%s1 + $0x30] sm:$0xff]
          %v639 = vld [vmem:[%s1 + $0x38] sm:$0xff]
          %vm640 = vcmask 523264
          %v642 = vsel %vm640, %v631, 0
          %644 = vmatpush.msra.mxu0 0.0
          %645 = vmatpush.msra.mxu0 0.0
          %646 = vmatpush.msra.mxu0 0.0
          %647 = vmatpush.msra.mxu0 0.0
          %648 = vmatpush.msra.mxu0 0.0
          %649 = vmatpush.msra.mxu0 0.0
          %650 = vmatpush.msra.mxu0 0.0
          %651 = vmatpush.msra.mxu0 0.0
          %652 = vmatpush.msra.mxu0 %v639
          %653 = vmatpush.msra.mxu0 %v638
          %654 = vmatpush.msra.mxu0 %v637
          %655 = vmatpush.msra.mxu0 %v636
          %656 = vmatpush.msra.mxu0 %v635
          %657 = vmatpush.msra.mxu0 %v634
          %658 = vmatpush.msra.mxu0 %v633
          %659 = vmatpush.msra.mxu0 %v632
          %660 = vmatmul.f32.gmra.mxu0 %v642
          %v661 = vpop.f32.mrf.mxu0
          %v662 = vadd.f32 0.0, %v661
          %663 = vdwg.mxu0
          %v664 = vmul.f32 %v662, 5.656854
          %v665 = vld [vmem:[%s2] sm:$0xff]
          %v666 = vadd.f32 %v664, %v665
          %vm667 = vcmask 261120
          %668 = vst.msk [vmem:[#allocation2] sm:$0xff] %vm667, %v666
        $region100: #{tpu_custom_call.1} parent=91 // pred_fallthru
          _
        %v669 = vld [vmem:[#allocation2] sm:$0xff]
        %s670 = smul.u32 %s38, 32
        %s671 = scalar_lea.vmem %s4, %s670
        %v672 = vld [vmem:[%s671] sm:$0xff]
        %v673 = vld [vmem:[%s671 + $0x8] sm:$0xff]
        %v674 = vld [vmem:[%s671 + $0x10] sm:$0xff]
        %v675 = vld [vmem:[%s671 + $0x18] sm:$0xff]
        %s676 = scalar_lea.vmem %s5, %s670
        %v677 = vld [vmem:[%s676] sm:$0xff]
        %v678 = vld [vmem:[%s676 + $0x8] sm:$0xff]
        %v679 = vld [vmem:[%s676 + $0x10] sm:$0xff]
        %v680 = vld [vmem:[%s676 + $0x18] sm:$0xff]
        %s681 = scalar_lea.vmem %s6, %s670
        %v682 = vld [vmem:[%s681] sm:$0xff]
        %v683 = vld [vmem:[%s681 + $0x8] sm:$0xff]
        %v684 = vld [vmem:[%s681 + $0x10] sm:$0xff]
        %v685 = vld [vmem:[%s681 + $0x18] sm:$0xff]
        %s686 = scalar_lea.vmem %s7, %s670
        %v687 = vld [vmem:[%s686] sm:$0xff]
        %v688 = vld [vmem:[%s686 + $0x8] sm:$0xff]
        %v689 = vld [vmem:[%s686 + $0x10] sm:$0xff]
        %v690 = vld [vmem:[%s686 + $0x18] sm:$0xff]
        %vm691 = vcmask 261120
        %v693 = vsel %vm691, %v669, 0
        %695 = vmatpush.msra.mxu0 0.0
        %696 = vmatpush.msra.mxu0 0.0
        %697 = vmatpush.msra.mxu0 0.0
        %698 = vmatpush.msra.mxu0 0.0
        %699 = vmatpush.msra.mxu0 0.0
        %700 = vmatpush.msra.mxu0 0.0
        %701 = vmatpush.msra.mxu0 0.0
        %702 = vmatpush.msra.mxu0 0.0
        %703 = vmatpush.msra.mxu0 0.0
        %704 = vmatpush.msra.mxu0 0.0
        %705 = vmatpush.msra.mxu0 0.0
        %706 = vmatpush.msra.mxu0 0.0
        %707 = vmatpush.msra.mxu0 %v675
        %708 = vmatpush.msra.mxu0 %v674
        %709 = vmatpush.msra.mxu0 %v673
        %710 = vmatpush.msra.mxu0 %v672
        %711 = vmatmul.f32.gmra.mxu0 %v693
        %v712 = vpop.f32.mrf.mxu0
        %v713 = vadd.f32 0.0, %v712
        %714 = vdwg.mxu0
        %715 = vmatpush.msra.mxu0 0.0
        %716 = vmatpush.msra.mxu0 0.0
        %717 = vmatpush.msra.mxu0 0.0
        %718 = vmatpush.msra.mxu0 0.0
        %719 = vmatpush.msra.mxu0 0.0
        %720 = vmatpush.msra.mxu0 0.0
        %721 = vmatpush.msra.mxu0 0.0
        %722 = vmatpush.msra.mxu0 0.0
        %723 = vmatpush.msra.mxu0 0.0
        %724 = vmatpush.msra.mxu0 0.0
        %725 = vmatpush.msra.mxu0 0.0
        %726 = vmatpush.msra.mxu0 0.0
        %727 = vmatpush.msra.mxu0 %v680
        %728 = vmatpush.msra.mxu0 %v679
        %729 = vmatpush.msra.mxu0 %v678
        %730 = vmatpush.msra.mxu0 %v677
        %731 = vmatmul.f32.gmra.mxu0 %v693
        %v732 = vpop.f32.mrf.mxu0
        %v733 = vadd.f32 0.0, %v732
        %734 = vdwg.mxu0
        %735 = vmatpush.msra.mxu0 0.0
        %736 = vmatpush.msra.mxu0 0.0
        %737 = vmatpush.msra.mxu0 0.0
        %738 = vmatpush.msra.mxu0 0.0
        %739 = vmatpush.msra.mxu0 0.0
        %740 = vmatpush.msra.mxu0 0.0
        %741 = vmatpush.msra.mxu0 0.0
        %742 = vmatpush.msra.mxu0 0.0
        %743 = vmatpush.msra.mxu0 0.0
        %744 = vmatpush.msra.mxu0 0.0
        %745 = vmatpush.msra.mxu0 0.0
        %746 = vmatpush.msra.mxu0 0.0
        %747 = vmatpush.msra.mxu0 %v685
        %748 = vmatpush.msra.mxu0 %v684
        %749 = vmatpush.msra.mxu0 %v683
        %750 = vmatpush.msra.mxu0 %v682
        %751 = vmatmul.f32.gmra.mxu0 %v693
        %v752 = vpop.f32.mrf.mxu0
        %v753 = vadd.f32 0.0, %v752
        %754 = vdwg.mxu0
        %v755 = vld [vmem:[%s618] sm:$0xff]
        %v756 = vld [vmem:[%s618 + $0x8] sm:$0xff]
        %v757 = vld [vmem:[%s618 + $0x10] sm:$0xff]
        %v758 = vld [vmem:[%s618 + $0x18] sm:$0xff]
        %vm759 = vcmask 64512
        %v761 = vsel %vm759, %v713, 0
        %v764 = vsel %vm759, %v733, 0
        %766 = vmatpush.xpose.msra.mxu0 0.0
        %767 = vmatpush.xpose.msra.mxu0 0.0
        %768 = vmatpush.xpose.msra.mxu0 0.0
        %769 = vmatpush.xpose.msra.mxu0 0.0
        %770 = vmatpush.xpose.msra.mxu0 0.0
        %771 = vmatpush.xpose.msra.mxu0 0.0
        %772 = vmatpush.xpose.msra.mxu0 0.0
        %773 = vmatpush.xpose.msra.mxu0 0.0
        %774 = vmatpush.xpose.msra.mxu0 0.0
        %775 = vmatpush.xpose.msra.mxu0 0.0
        %776 = vmatpush.xpose.msra.mxu0 0.0
        %777 = vmatpush.xpose.msra.mxu0 0.0
        %778 = vmatpush.xpose.msra.mxu0 0.0
        %779 = vmatpush.xpose.msra.mxu0 0.0
        %780 = vmatpush.xpose.msra.mxu0 0.0
        %781 = vmatpush.xpose.msra.mxu0 %v764
        %782 = vmatmul.f32.gmra.mxu0 %v761
        %v783 = vpop.f32.mrf.mxu0
        %v784 = vadd.f32 0.0, %v783
        %785 = vdwg.mxu0
        %v786 = vmul.f32 %v784, 0.17677669
        %vm787 = vcmp.eq.s32.totalorder %v755, 0
        %v788 = vsel %vm787, -1e+30, %v786
        %v789 = vsel %vm759, %v788, -inf
        %790 = vmax.xlane.f32.xlu0 %v789
        %v791 = vpop.xlane.xlu0 %790
        %v792 = vsub.f32 %v788, %v791
        %v793 = vmul.f32 %v792, 1.442695
        %v794 = vpow.pop %v793
        %v795 = vsel %vm759, %v794, 0.0
        %796 = vadd.xlane.f32.xlu0 %v795
        %v797 = vpop.xlane.xlu0 %796
        %v798 = vrcp.pop %v797
        %v799 = vmul.f32 %v797, %v798
        %v800 = vsub.f32 1.0, %v799
        %v801 = vmul.f32 %v798, %v800
        %v802 = vadd.f32 %v798, %v801
        %vm803 = vweird.f32 %v797
        %vm804 = vweird.f32 %v798
        %vm805 = vmor %vm803, %vm804
        %v806 = vsel %vm805, %v798, %v802
        %v807 = vand.u32 2147483647, %v797
        %vm808 = vcmp.eq.f32.partialorder %v807, 8.507059e+37
        %v809 = vand.u32 %v797, 2147483648
        %v810 = vor.u32 1.1754944e-38, %v809
        %v811 = vsel %vm808, %v810, %v806
        %v812 = vmul.f32 %v794, %v811
        %v814 = vsel %vm759, %v812, 0
        %816 = vmatpush.msra.mxu0 0.0
        %817 = vmatpush.msra.mxu0 0.0
        %818 = vmatpush.msra.mxu0 0.0
        %819 = vmatpush.msra.mxu0 0.0
        %820 = vmatpush.msra.mxu0 0.0
        %821 = vmatpush.msra.mxu0 0.0
        %822 = vmatpush.msra.mxu0 0.0
        %823 = vmatpush.msra.mxu0 0.0
        %824 = vmatpush.msra.mxu0 0.0
        %825 = vmatpush.msra.mxu0 0.0
        %826 = vmatpush.msra.mxu0 0.0
        %827 = vmatpush.msra.mxu0 0.0
        %828 = vmatpush.msra.mxu0 0.0
        %829 = vmatpush.msra.mxu0 0.0
        %830 = vmatpush.msra.mxu0 0.0
        %831 = vmatpush.msra.mxu0 %v753
        %832 = vmatmul.f32.gmra.mxu0 %v814
        %v833 = vpop.f32.mrf.mxu0
        %v834 = vadd.f32 0.0, %v833
        %835 = vdwg.mxu0
        %836 = vrot.lane.b32.xlu0 %v713, 120
        %v837 = vpop.permute.xlu0 %836
        %838 = vrot.lane.b32.xlu0 %v733, 120
        %v839 = vpop.permute.xlu0 %838
        %v840 = vsel %vm759, %v837, 0
        %v842 = vsel %vm759, %v839, 0
        %844 = vmatpush.xpose.msra.mxu0 0.0
        %845 = vmatpush.xpose.msra.mxu0 0.0
        %846 = vmatpush.xpose.msra.mxu0 0.0
        %847 = vmatpush.xpose.msra.mxu0 0.0
        %848 = vmatpush.xpose.msra.mxu0 0.0
        %849 = vmatpush.xpose.msra.mxu0 0.0
        %850 = vmatpush.xpose.msra.mxu0 0.0
        %851 = vmatpush.xpose.msra.mxu0 0.0
        %852 = vmatpush.xpose.msra.mxu0 0.0
        %853 = vmatpush.xpose.msra.mxu0 0.0
        %854 = vmatpush.xpose.msra.mxu0 0.0
        %855 = vmatpush.xpose.msra.mxu0 0.0
        %856 = vmatpush.xpose.msra.mxu0 0.0
        %857 = vmatpush.xpose.msra.mxu0 0.0
        %858 = vmatpush.xpose.msra.mxu0 0.0
        %859 = vmatpush.xpose.msra.mxu0 %v842
        %860 = vmatmul.f32.gmra.mxu0 %v840
        %v861 = vpop.f32.mrf.mxu0
        %v862 = vadd.f32 0.0, %v861
        %863 = vdwg.mxu0
        %v864 = vmul.f32 %v862, 0.17677669
        %vm865 = vcmp.eq.s32.totalorder %v756, 0
        %v866 = vsel %vm865, -1e+30, %v864
        %v867 = vsel %vm759, %v866, -inf
        %868 = vmax.xlane.f32.xlu0 %v867
        %v869 = vpop.xlane.xlu0 %868
        %v870 = vsub.f32 %v866, %v869
        %v871 = vmul.f32 %v870, 1.442695
        %v872 = vpow.pop %v871
        %v873 = vsel %vm759, %v872, 0.0
        %874 = vadd.xlane.f32.xlu0 %v873
        %v875 = vpop.xlane.xlu0 %874
        %v876 = vrcp.pop %v875
        %v877 = vmul.f32 %v875, %v876
        %v878 = vsub.f32 1.0, %v877
        %v879 = vmul.f32 %v876, %v878
        %v880 = vadd.f32 %v876, %v879
        %vm881 = vweird.f32 %v875
        %vm882 = vweird.f32 %v876
        %vm883 = vmor %vm881, %vm882
        %v884 = vsel %vm883, %v876, %v880
        %v885 = vand.u32 2147483647, %v875
        %vm886 = vcmp.eq.f32.partialorder %v885, 8.507059e+37
        %v887 = vand.u32 %v875, 2147483648
        %v888 = vor.u32 1.1754944e-38, %v887
        %v889 = vsel %vm886, %v888, %v884
        %v890 = vmul.f32 %v872, %v889
        %892 = vrot.lane.b32.xlu0 %v753, 120
        %v893 = vpop.permute.xlu0 %892
        %v896 = vsel %vm759, %v890, 0
        %898 = vmatpush.msra.mxu0 0.0
        %899 = vmatpush.msra.mxu0 0.0
        %900 = vmatpush.msra.mxu0 0.0
        %901 = vmatpush.msra.mxu0 0.0
        %902 = vmatpush.msra.mxu0 0.0
        %903 = vmatpush.msra.mxu0 0.0
        %904 = vmatpush.msra.mxu0 0.0
        %905 = vmatpush.msra.mxu0 0.0
        %906 = vmatpush.msra.mxu0 0.0
        %907 = vmatpush.msra.mxu0 0.0
        %908 = vmatpush.msra.mxu0 0.0
        %909 = vmatpush.msra.mxu0 0.0
        %910 = vmatpush.msra.mxu0 0.0
        %911 = vmatpush.msra.mxu0 0.0
        %912 = vmatpush.msra.mxu0 0.0
        %913 = vmatpush.msra.mxu0 %v893
        %914 = vmatmul.f32.gmra.mxu0 %v896
        %v915 = vpop.f32.mrf.mxu0
        %v916 = vadd.f32 0.0, %v915
        %917 = vdwg.mxu0
        %918 = vrot.lane.b32.xlu0 %v713, 112
        %v919 = vpop.permute.xlu0 %918
        %920 = vrot.lane.b32.xlu0 %v733, 112
        %v921 = vpop.permute.xlu0 %920
        %v922 = vsel %vm759, %v919, 0
        %v924 = vsel %vm759, %v921, 0
        %926 = vmatpush.xpose.msra.mxu0 0.0
        %927 = vmatpush.xpose.msra.mxu0 0.0
        %928 = vmatpush.xpose.msra.mxu0 0.0
        %929 = vmatpush.xpose.msra.mxu0 0.0
        %930 = vmatpush.xpose.msra.mxu0 0.0
        %931 = vmatpush.xpose.msra.mxu0 0.0
        %932 = vmatpush.xpose.msra.mxu0 0.0
        %933 = vmatpush.xpose.msra.mxu0 0.0
        %934 = vmatpush.xpose.msra.mxu0 0.0
        %935 = vmatpush.xpose.msra.mxu0 0.0
        %936 = vmatpush.xpose.msra.mxu0 0.0
        %937 = vmatpush.xpose.msra.mxu0 0.0
        %938 = vmatpush.xpose.msra.mxu0 0.0
        %939 = vmatpush.xpose.msra.mxu0 0.0
        %940 = vmatpush.xpose.msra.mxu0 0.0
        %941 = vmatpush.xpose.msra.mxu0 %v924
        %942 = vmatmul.f32.gmra.mxu0 %v922
        %v943 = vpop.f32.mrf.mxu0
        %v944 = vadd.f32 0.0, %v943
        %945 = vdwg.mxu0
        %v946 = vmul.f32 %v944, 0.17677669
        %vm947 = vcmp.eq.s32.totalorder %v757, 0
        %v948 = vsel %vm947, -1e+30, %v946
        %v949 = vsel %vm759, %v948, -inf
        %950 = vmax.xlane.f32.xlu0 %v949
        %v951 = vpop.xlane.xlu0 %950
        %v952 = vsub.f32 %v948, %v951
        %v953 = vmul.f32 %v952, 1.442695
        %v954 = vpow.pop %v953
        %v955 = vsel %vm759, %v954, 0.0
        %956 = vadd.xlane.f32.xlu0 %v955
        %v957 = vpop.xlane.xlu0 %956
        %v958 = vrcp.pop %v957
        %v959 = vmul.f32 %v957, %v958
        %v960 = vsub.f32 1.0, %v959
        %v961 = vmul.f32 %v958, %v960
        %v962 = vadd.f32 %v958, %v961
        %vm963 = vweird.f32 %v957
        %vm964 = vweird.f32 %v958
        %vm965 = vmor %vm963, %vm964
        %v966 = vsel %vm965, %v958, %v962
        %v967 = vand.u32 2147483647, %v957
        %vm968 = vcmp.eq.f32.partialorder %v967, 8.507059e+37
        %v969 = vand.u32 %v957, 2147483648
        %v970 = vor.u32 1.1754944e-38, %v969
        %v971 = vsel %vm968, %v970, %v966
        %v972 = vmul.f32 %v954, %v971
        %973 = vrot.lane.b32.xlu0 %v753, 112
        %v974 = vpop.permute.xlu0 %973
        %v977 = vsel %vm759, %v972, 0
        %979 = vmatpush.msra.mxu0 0.0
        %980 = vmatpush.msra.mxu0 0.0
        %981 = vmatpush.msra.mxu0 0.0
        %982 = vmatpush.msra.mxu0 0.0
        %983 = vmatpush.msra.mxu0 0.0
        %984 = vmatpush.msra.mxu0 0.0
        %985 = vmatpush.msra.mxu0 0.0
        %986 = vmatpush.msra.mxu0 0.0
        %987 = vmatpush.msra.mxu0 0.0
        %988 = vmatpush.msra.mxu0 0.0
        %989 = vmatpush.msra.mxu0 0.0
        %990 = vmatpush.msra.mxu0 0.0
        %991 = vmatpush.msra.mxu0 0.0
        %992 = vmatpush.msra.mxu0 0.0
        %993 = vmatpush.msra.mxu0 0.0
        %994 = vmatpush.msra.mxu0 %v974
        %995 = vmatmul.f32.gmra.mxu0 %v977
        %v996 = vpop.f32.mrf.mxu0
        %v997 = vadd.f32 0.0, %v996
        %998 = vdwg.mxu0
        %999 = vrot.lane.b32.xlu0 %v713, 104
        %v1000 = vpop.permute.xlu0 %999
        %1001 = vrot.lane.b32.xlu0 %v733, 104
        %v1002 = vpop.permute.xlu0 %1001
        %v1003 = vsel %vm759, %v1000, 0
        %v1005 = vsel %vm759, %v1002, 0
        %1007 = vmatpush.xpose.msra.mxu0 0.0
        %1008 = vmatpush.xpose.msra.mxu0 0.0
        %1009 = vmatpush.xpose.msra.mxu0 0.0
        %1010 = vmatpush.xpose.msra.mxu0 0.0
        %1011 = vmatpush.xpose.msra.mxu0 0.0
        %1012 = vmatpush.xpose.msra.mxu0 0.0
        %1013 = vmatpush.xpose.msra.mxu0 0.0
        %1014 = vmatpush.xpose.msra.mxu0 0.0
        %1015 = vmatpush.xpose.msra.mxu0 0.0
        %1016 = vmatpush.xpose.msra.mxu0 0.0
        %1017 = vmatpush.xpose.msra.mxu0 0.0
        %1018 = vmatpush.xpose.msra.mxu0 0.0
        %1019 = vmatpush.xpose.msra.mxu0 0.0
        %1020 = vmatpush.xpose.msra.mxu0 0.0
        %1021 = vmatpush.xpose.msra.mxu0 0.0
        %1022 = vmatpush.xpose.msra.mxu0 %v1005
        %1023 = vmatmul.f32.gmra.mxu0 %v1003
        %v1024 = vpop.f32.mrf.mxu0
        %v1025 = vadd.f32 0.0, %v1024
        %1026 = vdwg.mxu0
        %v1027 = vmul.f32 %v1025, 0.17677669
        %vm1028 = vcmp.eq.s32.totalorder %v758, 0
        %v1029 = vsel %vm1028, -1e+30, %v1027
        %v1030 = vsel %vm759, %v1029, -inf
        %1031 = vmax.xlane.f32.xlu0 %v1030
        %v1032 = vpop.xlane.xlu0 %1031
        %v1033 = vsub.f32 %v1029, %v1032
        %v1034 = vmul.f32 %v1033, 1.442695
        %v1035 = vpow.pop %v1034
        %v1036 = vsel %vm759, %v1035, 0.0
        %1037 = vadd.xlane.f32.xlu0 %v1036
        %v1038 = vpop.xlane.xlu0 %1037
        %v1039 = vrcp.pop %v1038
        %v1040 = vmul.f32 %v1038, %v1039
        %v1041 = vsub.f32 1.0, %v1040
        %v1042 = vmul.f32 %v1039, %v1041
        %v1043 = vadd.f32 %v1039, %v1042
        %vm1044 = vweird.f32 %v1038
        %vm1045 = vweird.f32 %v1039
        %vm1046 = vmor %vm1044, %vm1045
        %v1047 = vsel %vm1046, %v1039, %v1043
        %v1048 = vand.u32 2147483647, %v1038
        %vm1049 = vcmp.eq.f32.partialorder %v1048, 8.507059e+37
        %v1050 = vand.u32 %v1038, 2147483648
        %v1051 = vor.u32 1.1754944e-38, %v1050
        %v1052 = vsel %vm1049, %v1051, %v1047
        %v1053 = vmul.f32 %v1035, %v1052
        %1054 = vrot.lane.b32.xlu0 %v753, 104
        %v1055 = vpop.permute.xlu0 %1054
        %v1058 = vsel %vm759, %v1053, 0
        %1060 = vmatpush.msra.mxu0 0.0
        %1061 = vmatpush.msra.mxu0 0.0
        %1062 = vmatpush.msra.mxu0 0.0
        %1063 = vmatpush.msra.mxu0 0.0
        %1064 = vmatpush.msra.mxu0 0.0
        %1065 = vmatpush.msra.mxu0 0.0
        %1066 = vmatpush.msra.mxu0 0.0
        %1067 = vmatpush.msra.mxu0 0.0
        %1068 = vmatpush.msra.mxu0 0.0
        %1069 = vmatpush.msra.mxu0 0.0
        %1070 = vmatpush.msra.mxu0 0.0
        %1071 = vmatpush.msra.mxu0 0.0
        %1072 = vmatpush.msra.mxu0 0.0
        %1073 = vmatpush.msra.mxu0 0.0
        %1074 = vmatpush.msra.mxu0 0.0
        %1075 = vmatpush.msra.mxu0 %v1055
        %1076 = vmatmul.f32.gmra.mxu0 %v1058
        %v1077 = vpop.f32.mrf.mxu0
        %v1078 = vadd.f32 0.0, %v1077
        %1079 = vdwg.mxu0
        %1081 = vrot.lane.b32.xlu0 %v916, 8
        %v1082 = vpop.permute.xlu0 %1081
        %1085 = vrot.lane.b32.xlu0 %v997, 16
        %v1086 = vpop.permute.xlu0 %1085
        %1089 = vrot.lane.b32.xlu0 %v1078, 24
        %v1090 = vpop.permute.xlu0 %1089
        %v1092 = vsel %vm759, %v834, %v1082
        %vm1093 = vcmask 130048
        %v1094 = vsel %vm1093, %v1092, %v1086
        %vm1095 = vcmask 195584
        %v1096 = vsel %vm1095, %v1094, %v1090
        %v1098 = vsel %vm691, %v1096, 0
        %1100 = vmatpush.msra.mxu0 0.0
        %1101 = vmatpush.msra.mxu0 0.0
        %1102 = vmatpush.msra.mxu0 0.0
        %1103 = vmatpush.msra.mxu0 0.0
        %1104 = vmatpush.msra.mxu0 0.0
        %1105 = vmatpush.msra.mxu0 0.0
        %1106 = vmatpush.msra.mxu0 0.0
        %1107 = vmatpush.msra.mxu0 0.0
        %1108 = vmatpush.msra.mxu0 0.0
        %1109 = vmatpush.msra.mxu0 0.0
        %1110 = vmatpush.msra.mxu0 0.0
        %1111 = vmatpush.msra.mxu0 0.0
        %1112 = vmatpush.msra.mxu0 %v690
        %1113 = vmatpush.msra.mxu0 %v689
        %1114 = vmatpush.msra.mxu0 %v688
        %1115 = vmatpush.msra.mxu0 %v687
        %1116 = vmatmul.f32.gmra.mxu0 %v1098
        %v1117 = vpop.f32.mrf.mxu0
        %v1118 = vadd.f32 0.0, %v1117
        %1119 = vdwg.mxu0
        %v1120 = vadd.f32 %v669, %v1118
        %v1121 = vsel %vm691, %v1120, 0.0
        %1122 = vadd.xlane.f32.xlu0 %v1121
        %v1123 = vpop.xlane.xlu0 %1122
        %v1124 = vrcp.pop 32.0
        %v1125 = vmul.f32 32.0, %v1124
        %v1126 = vsub.f32 1.0, %v1125
        %v1127 = vmul.f32 %v1124, %v1126
        %v1128 = vadd.f32 %v1124, %v1127
        %vm1129 = vweird.f32 %v1124
        %v1130 = vsel %vm1129, %v1124, %v1128
        %v1131 = vmul.f32 %v1123, %v1130
        %v1132 = vsub.f32 %v1120, %v1131
        %v1133 = vmul.f32 %v1132, %v1132
        %v1134 = vsel %vm691, %v1133, 0.0
        %1135 = vadd.xlane.f32.xlu0 %v1134
        %v1136 = vpop.xlane.xlu0 %1135
        %v1137 = vmul.f32 %v1136, %v1130
        %v1138 = vadd.f32 %v1137, 1e-05
        %v1139 = vrsqrt.pop %v1138
        %v1140 = vmul.f32 %v1139, %v1138
        %v1141 = vmul.f32 %v1140, %v1139
        %v1142 = vmul.f32 0.5, %v1141
        %v1143 = vsub.f32 1.5, %v1142
        %v1144 = vmul.f32 %v1139, %v1143
        %vm1145 = vweird.f32 %v1138
        %vm1146 = vweird.f32 %v1139
        %vm1147 = vmor %vm1145, %vm1146
        %v1148 = vsel %vm1147, %v1139, %v1144
        %v1149 = vmul.f32 %v1132, %v1148
        %s1150 = scalar_lea.vmem %s8, %s38
        %v1151 = vld [vmem:[%s1150] sm:$0x1]
        %v1153 = vperm.slane %v1151, 0
        %v1155 = vmul.f32 %v1149, %v1153
        %s1156 = scalar_lea.vmem %s9, %s38
        %v1157 = vld [vmem:[%s1156] sm:$0x1]
        %v1159 = vperm.slane %v1157, 0
        %v1161 = vadd.f32 %v1155, %v1159
        %s1162 = scalar_lea.vmem [#allocation3], %s670
        %v1163 = vld [vmem:[%s1162] sm:$0xff]
        %v1164 = vld [vmem:[%s1162 + $0x8] sm:$0xff]
        %v1165 = vld [vmem:[%s1162 + $0x10] sm:$0xff]
        %v1166 = vld [vmem:[%s1162 + $0x18] sm:$0xff]
        %s1167 = scalar_lea.vmem %s11, %s38
        %v1168 = vld [vmem:[%s1167] sm:$0x1]
        %v1170 = vperm.slane %v1168, 0
        %v1173 = vsel %vm691, %v1161, 0
        %1175 = vmatpush.msra.mxu0 0.0
        %1176 = vmatpush.msra.mxu0 0.0
        %1177 = vmatpush.msra.mxu0 0.0
        %1178 = vmatpush.msra.mxu0 0.0
        %1179 = vmatpush.msra.mxu0 0.0
        %1180 = vmatpush.msra.mxu0 0.0
        %1181 = vmatpush.msra.mxu0 0.0
        %1182 = vmatpush.msra.mxu0 0.0
        %1183 = vmatpush.msra.mxu0 0.0
        %1184 = vmatpush.msra.mxu0 0.0
        %1185 = vmatpush.msra.mxu0 0.0
        %1186 = vmatpush.msra.mxu0 0.0
        %1187 = vmatpush.msra.mxu0 %v1166
        %1188 = vmatpush.msra.mxu0 %v1165
        %1189 = vmatpush.msra.mxu0 %v1164
        %1190 = vmatpush.msra.mxu0 %v1163
        %1191 = vmatmul.f32.gmra.mxu0 %v1173
        %v1192 = vpop.f32.mrf.mxu0
        %v1193 = vadd.f32 %v1170, %v1192
        %1194 = vdwg.mxu0
        %v1195 = vmax.f32 %v1193, 0.0
        %s1196 = smul.u32 %s38, 128
        %s1197 = scalar_lea.vmem %s12, %s1196
        %v1198 = vld [vmem:[%s1197] sm:$0xff]
        %v1199 = vld [vmem:[%s1197 + $0x8] sm:$0xff]
        %v1200 = vld [vmem:[%s1197 + $0x10] sm:$0xff]
        %v1201 = vld [vmem:[%s1197 + $0x18] sm:$0xff]
        %v1202 = vld [vmem:[%s1197 + $0x20] sm:$0xff]
        %v1203 = vld [vmem:[%s1197 + $0x28] sm:$0xff]
        %v1204 = vld [vmem:[%s1197 + $0x30] sm:$0xff]
        %v1205 = vld [vmem:[%s1197 + $0x38] sm:$0xff]
        %v1206 = vld [vmem:[%s1197 + $0x40] sm:$0xff]
        %v1207 = vld [vmem:[%s1197 + $0x48] sm:$0xff]
        %v1208 = vld [vmem:[%s1197 + $0x50] sm:$0xff]
        %v1209 = vld [vmem:[%s1197 + $0x58] sm:$0xff]
        %v1210 = vld [vmem:[%s1197 + $0x60] sm:$0xff]
        %v1211 = vld [vmem:[%s1197 + $0x68] sm:$0xff]
        %v1212 = vld [vmem:[%s1197 + $0x70] sm:$0xff]
        %v1213 = vld [vmem:[%s1197 + $0x78] sm:$0xff]
        %s1214 = scalar_lea.vmem %s13, %s38
        %v1215 = vld [vmem:[%s1214] sm:$0x1]
        %v1217 = vperm.slane %v1215, 0
        %1219 = vmatpush.msra.mxu0 %v1213
        %1220 = vmatpush.msra.mxu0 %v1212
        %1221 = vmatpush.msra.mxu0 %v1211
        %1222 = vmatpush.msra.mxu0 %v1210
        %1223 = vmatpush.msra.mxu0 %v1209
        %1224 = vmatpush.msra.mxu0 %v1208
        %1225 = vmatpush.msra.mxu0 %v1207
        %1226 = vmatpush.msra.mxu0 %v1206
        %1227 = vmatpush.msra.mxu0 %v1205
        %1228 = vmatpush.msra.mxu0 %v1204
        %1229 = vmatpush.msra.mxu0 %v1203
        %1230 = vmatpush.msra.mxu0 %v1202
        %1231 = vmatpush.msra.mxu0 %v1201
        %1232 = vmatpush.msra.mxu0 %v1200
        %1233 = vmatpush.msra.mxu0 %v1199
        %1234 = vmatpush.msra.mxu0 %v1198
        %1235 = vmatmul.f32.gmra.mxu0 %v1195
        %v1236 = vpop.f32.mrf.mxu0
        %v1237 = vadd.f32 %v1217, %v1236
        %1238 = vdwg.mxu0
        %v1239 = vadd.f32 %v1161, %v1237
        %v1240 = vsel %vm691, %v1239, 0.0
        %1241 = vadd.xlane.f32.xlu0 %v1240
        %v1242 = vpop.xlane.xlu0 %1241
        %v1243 = vmul.f32 %v1242, %v1130
        %v1244 = vsub.f32 %v1239, %v1243
        %v1245 = vmul.f32 %v1244, %v1244
        %v1246 = vsel %vm691, %v1245, 0.0
        %1247 = vadd.xlane.f32.xlu0 %v1246
        %v1248 = vpop.xlane.xlu0 %1247
        %v1249 = vmul.f32 %v1248, %v1130
        %v1250 = vadd.f32 %v1249, 1e-05
        %v1251 = vrsqrt.pop %v1250
        %v1252 = vmul.f32 %v1251, %v1250
        %v1253 = vmul.f32 %v1252, %v1251
        %v1254 = vmul.f32 0.5, %v1253
        %v1255 = vsub.f32 1.5, %v1254
        %v1256 = vmul.f32 %v1251, %v1255
        %vm1257 = vweird.f32 %v1250
        %vm1258 = vweird.f32 %v1251
        %vm1259 = vmor %vm1257, %vm1258
        %v1260 = vsel %vm1259, %v1251, %v1256
        %v1261 = vmul.f32 %v1244, %v1260
        %s1262 = scalar_lea.vmem %s14, %s38
        %v1263 = vld [vmem:[%s1262] sm:$0x1]
        %v1265 = vperm.slane %v1263, 0
        %v1267 = vmul.f32 %v1261, %v1265
        %s1268 = scalar_lea.vmem %s15, %s38
        %v1269 = vld [vmem:[%s1268] sm:$0x1]
        %v1271 = vperm.slane %v1269, 0
        %v1273 = vadd.f32 %v1267, %v1271
        %1274 = vst.msk [vmem:[#allocation2] sm:$0xff] %vm691, %v1273
        %p1275 = scmp.eq.s32.totalorder %s38, 1
        // Predicated region
        $region101: #{tpu_custom_call.1} parent=91 // pred_check
          %p1276 = pneg %p1275
        $region102: #{tpu_custom_call.1} parent=91 // pred_check_branch
          %1278 = sbr.rel (%p1276) target = $region104
        $region103: #{tpu_custom_call.1} parent=91 // pred_region
          %v1279 = vsel %vm691, %v1273, 0.0
          %v1280 = vrot.slane %v1279, 4
          %v1281 = vadd.f32 %v1279, %v1280
          %v1282 = vrot.slane %v1281, 2
          %v1283 = vadd.f32 %v1281, %v1282
          %v1284 = vrot.slane %v1283, 1
          %v1285 = vadd.f32 %v1283, %v1284
          %v1286 = vmul.f32 %v1285, 0.125
          %v1287 = vld [vmem:[%s16] sm:$0xff]
          %v1288 = vld [vmem:[%s16 + $0x8] sm:$0xff]
          %v1289 = vld [vmem:[%s16 + $0x10] sm:$0xff]
          %v1290 = vld [vmem:[%s16 + $0x18] sm:$0xff]
          %v1291 = vld [vmem:[%s17] sm:$0x1]
          %v1293 = vsel %vm691, %v1286, 0
          %1295 = vmatpush.msra.mxu0 0.0
          %1296 = vmatpush.msra.mxu0 0.0
          %1297 = vmatpush.msra.mxu0 0.0
          %1298 = vmatpush.msra.mxu0 0.0
          %1299 = vmatpush.msra.mxu0 0.0
          %1300 = vmatpush.msra.mxu0 0.0
          %1301 = vmatpush.msra.mxu0 0.0
          %1302 = vmatpush.msra.mxu0 0.0
          %1303 = vmatpush.msra.mxu0 0.0
          %1304 = vmatpush.msra.mxu0 0.0
          %1305 = vmatpush.msra.mxu0 0.0
          %1306 = vmatpush.msra.mxu0 0.0
          %1307 = vmatpush.msra.mxu0 %v1290
          %1308 = vmatpush.msra.mxu0 %v1289
          %1309 = vmatpush.msra.mxu0 %v1288
          %1310 = vmatpush.msra.mxu0 %v1287
          %1311 = vmatmul.f32.gmra.mxu0 %v1293
          %v1312 = vpop.f32.mrf.mxu0
          %v1313 = vadd.f32 %v1291, %v1312
          %1314 = vdwg.mxu0
          %vm1315 = vcmask 8192
          %v1316 = vsel %vm1315, %v1313, -inf
          %1317 = vmax.xlane.f32.xlu0 %v1316
          %v1318 = vpop.xlane.xlu0 %1317
          %v1319 = vsub.f32 %v1313, %v1318
          %v1320 = vmul.f32 %v1319, 1.442695
          %v1321 = vpow.pop %v1320
          %v1322 = vsel %vm1315, %v1321, 0.0
          %1323 = vadd.xlane.f32.xlu0 %v1322
          %v1324 = vpop.xlane.xlu0 %1323
          %v1325 = vlog2.pop %v1324
          %v1326 = vmul.f32 %v1325, 0.6931472
          %v1327 = vsub.f32 %v1319, %v1326
          %1328 = vst.msk [vmem:[%s609] sm:$0x1] %vm1315, %v1327
        $region104: #{tpu_custom_call.1} parent=91 // pred_fallthru
          _
        %s1329 = sand.u32 %s441, 1
        %s1330 = scalar_lea.sflag [#allocation5], %s1329
        %s1331 = sand.u32 %s441, 1
        %s1332 = scalar_lea.vmem [#allocation6], %s1331
        // Predicated region
        $region105: #{tpu_custom_call.1} parent=91 // pred_check
          %p1333 = pneg %p451
        $region106: #{tpu_custom_call.1} parent=91 // pred_check_branch
          %1335 = sbr.rel (%p1333) target = $region108
        $region107: #{tpu_custom_call.1} parent=91 // pred_region
          %1337 = vsyncadd %s1330, 0
          %s1338 = scalar_lea.hbm %s18, %s37
          %s1340 = sshll.u32 %s1332, 4
          %s1341 = int_to_ptr.vmem [resolvable:$true] %s1340
          %s1342 = sshll.u32 %s1338, 4
          %s1343 = int_to_ptr.hbm [resolvable:$true] %s1342
          %1345 = dma.vmem_to_hbm [thread:$0]  %s1341, 16, %s1343, %s1330
        $region108: #{tpu_custom_call.1} parent=91 // pred_fallthru
          _
      $region92: #{tpu_custom_call.1} parent=5 // pred_fallthru
        _
      %p1346 = scmp.le.s32.totalorder 2, %s28
      // Predicated region
      $region109: #{tpu_custom_call.1} parent=5 // pred_check
        %p1347 = pneg %p1346
      $region110: #{tpu_custom_call.1} parent=5 // pred_check_branch
        %1349 = sbr.rel (%p1347) target = $region112
      $region111: #{tpu_custom_call.1} parent=5 // pred_region
        %s1350 = ssub.s32 %s28, 2
        // Predicated region
        $region113: #{tpu_custom_call.1} parent=111 // pred_check
          %p1351 = pneg %p457
        $region114: #{tpu_custom_call.1} parent=111 // pred_check_branch
          %1353 = sbr.rel (%p1351) target = $region116
        $region115: #{tpu_custom_call.1} parent=111 // pred_region
          %s1354 = sand.u32 %s442, 1
          %s1355 = scalar_lea.sflag [#allocation5], %s1354
          %s1356 = sand.u32 %s442, 1
          %s1357 = scalar_lea.vmem [#allocation6], %s1356
          %1359 = dma.done %s1355, 16
        $region116: #{tpu_custom_call.1} parent=111 // pred_fallthru
          _
      $region112: #{tpu_custom_call.1} parent=5 // pred_fallthru
        _
    $region6: #{tpu_custom_call.1} parent=1 // loop_footer
      %s32 = sadd.s32 1, %s28
    $region7: #{tpu_custom_call.1} parent=1 // loop_footer_branch
      %27 = sbr.rel target = $region3
    $region8: #{tpu_custom_call.1} parent=1 // loop_exit
      _
    %1360 = vsyncpa [#allocation4], 1
    %s1361 = scalar_lea.sflag [#allocation4], 1
    %1362 = vsyncpa %s1361, 1
    %1363 = vsyncpa [#allocation5], 1
    %s1364 = scalar_lea.sflag [#allocation5], 1
    %1365 = vsyncpa %s1364, 1

</llo_original>
